<compile_context>
chip_gen: v7x
topology: tpu7x:2x2x1
jax: 0.10.0
libtpu: 0.0.40
codegen_flags: <defaults>
</compile_context>

<pallas_src>
import math

import numpy as np
import jax
import jax.numpy as jnp
from jax.experimental import pallas as pl
from jax.experimental.pallas import tpu as pltpu


def _butterfly_product_kernel(m_ref, x_ref, o_ref, acc_ref):
    """One batch tile of ButterflyProduct.forward with prob pre-folded into the matrices.

    m_ref   : VMEM (n_terms, size, size), compute dtype (bf16/f32) -- M_i = sum_k prob[i,k] * B_k.T
    x_ref   : VMEM (block_batch, size)
    o_ref   : VMEM (block_batch, size)
    acc_ref : VMEM (block_batch, size) f32 scratch -- running activation
    """
    n_terms = m_ref.shape[0]
    acc_ref[...] = x_ref[...].astype(jnp.float32)
    # MatrixProduct.forward (not fixed_order), with the softmax combine already folded:
    #   for i in reversed(range(n_terms)): out = out @ M_i
    for i in range(n_terms - 1, -1, -1):
        acc_ref[...] = jnp.dot(acc_ref[...].astype(m_ref.dtype), m_ref[i],
                               preferred_element_type=jnp.float32)
    o_ref[...] = acc_ref[...].astype(o_ref.dtype)


def init_butterfly_product_params(key, size, n_terms=None):
    """Deterministic stand-in for ButterflyProduct.__init__ parameter shapes."""
    m = int(math.log2(size))
    assert size == 1 << m, "size must be a power of 2"
    diagonals = [1 << i for i in range(m)][::-1]          # [size/2, ..., 2, 1]
    if n_terms is None:
        n_terms = m
    keys = jax.random.split(key, 3 * m + 1)
    diags, subdiags, superdiags = [], [], []
    for k, d in enumerate(diagonals):
        diags.append(jax.random.normal(keys[3 * k], (size,), jnp.float32))
        subdiags.append(jax.random.normal(keys[3 * k + 1], (size - d,), jnp.float32))
        superdiags.append(jax.random.normal(keys[3 * k + 2], (size - d,), jnp.float32))
    logit = jax.random.normal(keys[-1], (n_terms, m), jnp.float32)
    return dict(diagonals=diagonals, diags=diags, subdiags=subdiags,
                superdiags=superdiags, logit=logit)


def butterfly_product_forward(x, params, temperature=1.0, block_batch=128,
                              compute_dtype=jnp.bfloat16):
    """Pallas-backed ButterflyProduct.forward. x: (..., size) float32."""
    size = x.shape[-1]
    diagonals = params["diagonals"]
    m = len(diagonals)
    n_terms = params["logit"].shape[0]

    # ---- glue: fold softmax(logit/T) into the dense butterfly matrices --------------------
    prob = jax.nn.softmax(params["logit"] / temperature, axis=-1).astype(jnp.float32)
    bstack = jnp.stack([
        jnp.diag(params["diags"][k])
        + jnp.diag(params["subdiags"][k], -diagonals[k])
        + jnp.diag(params["superdiags"][k], diagonals[k])
        for k in range(m)
    ]).astype(jnp.float32)                                         # (m, size, size)
    # M_i = (sum_k prob[i, k] * B_k).T  so the kernel computes out <- out @ M_i.
    m_stack = jnp.einsum("tk,kij->tji", prob, bstack).astype(compute_dtype)

    # ---- tiling ---------------------------------------------------------------------------
    batch_shape = x.shape[:-1]
    xf = x.reshape(-1, size)
    bsz = xf.shape[0]
    padded_bsz = pl.cdiv(bsz, block_batch) * block_batch
    if padded_bsz != bsz:
        xf = jnp.pad(xf, ((0, padded_bsz - bsz), (0, 0)))
    grid = (padded_bsz // block_batch,)

    itemsize = jnp.dtype(x.dtype).itemsize
    cost = pl.CostEstimate(
        flops=2 * padded_bsz * size * size * n_terms,
        transcendentals=0,
        bytes_accessed=2 * padded_bsz * size * itemsize
        + m_stack.size * jnp.dtype(compute_dtype).itemsize,
    )

    out = pl.pallas_call(
        _butterfly_product_kernel,
        out_shape=jax.ShapeDtypeStruct((padded_bsz, size), x.dtype),
        grid=grid,
        in_specs=[
            # Whole folded stack resident in VMEM once (no per-step double-buffering).
            pl.BlockSpec(memory_space=pltpu.MemorySpace.VMEM),
            pl.BlockSpec((block_batch, size), lambda b: (b, 0)),
        ],
        out_specs=pl.BlockSpec((block_batch, size), lambda b: (b, 0)),
        scratch_shapes=[pltpu.VMEM((block_batch, size), jnp.float32)],
        compiler_params=pltpu.CompilerParams(dimension_semantics=("parallel",)),
        cost_estimate=cost,
    )(m_stack, xf)
    return out[:bsz].reshape(*batch_shape, size)


# ---------------- pure-JAX reference (mirrors the PyTorch elementwise forward) --------------

def _butterfly_apply_ref(x, diag, subdiag, superdiag, d):
    out = diag * x
    out = out.at[..., d:].add(subdiag * x[..., :-d])
    out = out.at[..., :-d].add(superdiag * x[..., d:])
    return out


def reference_forward(x, params, temperature=1.0):
    diagonals = params["diagonals"]
    m = len(diagonals)
    logit = params["logit"]
    prob = jax.nn.softmax(logit / temperature, axis=-1)
    n_terms = logit.shape[0]
    out = x
    for i in range(n_terms - 1, -1, -1):
        stack = jnp.stack([
            _butterfly_apply_ref(out, params["diags"][k], params["subdiags"][k],
                                 params["superdiags"][k], diagonals[k])
            for k in range(m)
        ])
        out = jnp.tensordot(prob[i], stack, axes=1)
    return out


if __name__ == "__main__":
    size = 128                    # power of 2 -> m = 7 butterfly factors, n_terms = 7
    key = jax.random.PRNGKey(0)
    pkey, xkey = jax.random.split(key)
    params = init_butterfly_product_params(pkey, size)
    # 256 flattened rows -> two 128-row tiles -> grid of 2 "parallel" steps.
    x = jax.random.normal(xkey, (2, 128, size), jnp.float32)   # (..., size)

    out_bf16 = jax.block_until_ready(butterfly_product_forward(x, params))
    out_f32 = jax.block_until_ready(
        butterfly_product_forward(x, params, compute_dtype=jnp.float32))

    ref = reference_forward(x, params)
    # f32 path: tight tolerance (only reassociation differences vs. elementwise reference).
    np.testing.assert_allclose(np.asarray(out_f32), np.asarray(ref), rtol=5e-4, atol=5e-3)
    # bf16 operands / f32 accumulation path: 7 chained matmuls -> looser tolerance.
    np.testing.assert_allclose(np.asarray(out_bf16), np.asarray(ref), rtol=5e-2, atol=5e-2)
    print("KERNEL_OK")
</pallas_src>

<mosaic_0001>
module attributes {stable_mosaic.version = 11 : i64} {
  func.func @_butterfly_product_kernel(%arg0: i32, %arg1: memref<7x128x128xbf16, #tpu.memory_space<vmem>>, %arg2: memref<128x128xf32, #tpu.memory_space<vmem>>, %arg3: memref<128x128xf32, #tpu.memory_space<vmem>>, %arg4: memref<128x128xf32, #tpu.memory_space<vmem>>) attributes {dimension_semantics = [#tpu.dimension_semantics<parallel>], iteration_bounds = array<i64: 2>, scalar_prefetch = 0 : i64, scratch_operands = 1 : i64, tpu.core_type = #tpu.core_type<tc>, window_params = [{pipeline_mode = #tpu.pipeline_mode<synchronous>, transform_indices = @transform_0, window_bounds = array<i64: 7, 128, 128>}, {transform_indices = @transform_1, window_bounds = array<i64: 128, 128>}, {transform_indices = @transform_2, window_bounds = array<i64: 128, 128>}]} {
    %c0 = arith.constant 0 : index
    %c0_0 = arith.constant 0 : index
    %0 = vector.load %arg2[%c0, %c0_0] : memref<128x128xf32, #tpu.memory_space<vmem>>, vector<128x128xf32>
    %c0_1 = arith.constant 0 : index
    %c0_2 = arith.constant 0 : index
    %1 = vector.load %arg4[%c0_1, %c0_2] : memref<128x128xf32, #tpu.memory_space<vmem>>, vector<128x128xf32>
    tpu.vector_store %arg4[%c0_1, %c0_2], %0 {strides = array<i32>} : memref<128x128xf32, #tpu.memory_space<vmem>>, vector<128x128xf32>,
    %c0_3 = arith.constant 0 : index
    %c0_4 = arith.constant 0 : index
    %2 = vector.load %arg4[%c0_3, %c0_4] : memref<128x128xf32, #tpu.memory_space<vmem>>, vector<128x128xf32>
    %3 = arith.truncf %2 : vector<128x128xf32> to vector<128x128xbf16>
    %c6 = arith.constant 6 : index
    %c0_5 = arith.constant 0 : index
    %c0_6 = arith.constant 0 : index
    %4 = vector.load %arg1[%c6, %c0_5, %c0_6] : memref<7x128x128xbf16, #tpu.memory_space<vmem>>, vector<1x128x128xbf16>
    %5 = vector.shape_cast %4 : vector<1x128x128xbf16> to vector<128x128xbf16>
    %cst = arith.constant dense<0.000000e+00> : vector<128x128xf32>
    %6 = tpu.matmul %3, %5, %cst {dimension_numbers = #tpu.dot_dimension_numbers<[1], [0], [0], [1], [0, 0, 1, 1], [], []>} : vector<128x128xbf16>, vector<128x128xbf16>, vector<128x128xf32> -> vector<128x128xf32>
    %c0_7 = arith.constant 0 : index
    %c0_8 = arith.constant 0 : index
    %7 = vector.load %arg4[%c0_7, %c0_8] : memref<128x128xf32, #tpu.memory_space<vmem>>, vector<128x128xf32>
    tpu.vector_store %arg4[%c0_7, %c0_8], %6 {strides = array<i32>} : memref<128x128xf32, #tpu.memory_space<vmem>>, vector<128x128xf32>,
    %c0_9 = arith.constant 0 : index
    %c0_10 = arith.constant 0 : index
    %8 = vector.load %arg4[%c0_9, %c0_10] : memref<128x128xf32, #tpu.memory_space<vmem>>, vector<128x128xf32>
    %9 = arith.truncf %8 : vector<128x128xf32> to vector<128x128xbf16>
    %c5 = arith.constant 5 : index
    %c0_11 = arith.constant 0 : index
    %c0_12 = arith.constant 0 : index
    %10 = vector.load %arg1[%c5, %c0_11, %c0_12] : memref<7x128x128xbf16, #tpu.memory_space<vmem>>, vector<1x128x128xbf16>
    %11 = vector.shape_cast %10 : vector<1x128x128xbf16> to vector<128x128xbf16>
    %cst_13 = arith.constant dense<0.000000e+00> : vector<128x128xf32>
    %12 = tpu.matmul %9, %11, %cst_13 {dimension_numbers = #tpu.dot_dimension_numbers<[1], [0], [0], [1], [0, 0, 1, 1], [], []>} : vector<128x128xbf16>, vector<128x128xbf16>, vector<128x128xf32> -> vector<128x128xf32>
    %c0_14 = arith.constant 0 : index
    %c0_15 = arith.constant 0 : index
    %13 = vector.load %arg4[%c0_14, %c0_15] : memref<128x128xf32, #tpu.memory_space<vmem>>, vector<128x128xf32>
    tpu.vector_store %arg4[%c0_14, %c0_15], %12 {strides = array<i32>} : memref<128x128xf32, #tpu.memory_space<vmem>>, vector<128x128xf32>,
    %c0_16 = arith.constant 0 : index
    %c0_17 = arith.constant 0 : index
    %14 = vector.load %arg4[%c0_16, %c0_17] : memref<128x128xf32, #tpu.memory_space<vmem>>, vector<128x128xf32>
    %15 = arith.truncf %14 : vector<128x128xf32> to vector<128x128xbf16>
    %c4 = arith.constant 4 : index
    %c0_18 = arith.constant 0 : index
    %c0_19 = arith.constant 0 : index
    %16 = vector.load %arg1[%c4, %c0_18, %c0_19] : memref<7x128x128xbf16, #tpu.memory_space<vmem>>, vector<1x128x128xbf16>
    %17 = vector.shape_cast %16 : vector<1x128x128xbf16> to vector<128x128xbf16>
    %cst_20 = arith.constant dense<0.000000e+00> : vector<128x128xf32>
    %18 = tpu.matmul %15, %17, %cst_20 {dimension_numbers = #tpu.dot_dimension_numbers<[1], [0], [0], [1], [0, 0, 1, 1], [], []>} : vector<128x128xbf16>, vector<128x128xbf16>, vector<128x128xf32> -> vector<128x128xf32>
    %c0_21 = arith.constant 0 : index
    %c0_22 = arith.constant 0 : index
    %19 = vector.load %arg4[%c0_21, %c0_22] : memref<128x128xf32, #tpu.memory_space<vmem>>, vector<128x128xf32>
    tpu.vector_store %arg4[%c0_21, %c0_22], %18 {strides = array<i32>} : memref<128x128xf32, #tpu.memory_space<vmem>>, vector<128x128xf32>,
    %c0_23 = arith.constant 0 : index
    %c0_24 = arith.constant 0 : index
    %20 = vector.load %arg4[%c0_23, %c0_24] : memref<128x128xf32, #tpu.memory_space<vmem>>, vector<128x128xf32>
    %21 = arith.truncf %20 : vector<128x128xf32> to vector<128x128xbf16>
    %c3 = arith.constant 3 : index
    %c0_25 = arith.constant 0 : index
    %c0_26 = arith.constant 0 : index
    %22 = vector.load %arg1[%c3, %c0_25, %c0_26] : memref<7x128x128xbf16, #tpu.memory_space<vmem>>, vector<1x128x128xbf16>
    %23 = vector.shape_cast %22 : vector<1x128x128xbf16> to vector<128x128xbf16>
    %cst_27 = arith.constant dense<0.000000e+00> : vector<128x128xf32>
    %24 = tpu.matmul %21, %23, %cst_27 {dimension_numbers = #tpu.dot_dimension_numbers<[1], [0], [0], [1], [0, 0, 1, 1], [], []>} : vector<128x128xbf16>, vector<128x128xbf16>, vector<128x128xf32> -> vector<128x128xf32>
    %c0_28 = arith.constant 0 : index
    %c0_29 = arith.constant 0 : index
    %25 = vector.load %arg4[%c0_28, %c0_29] : memref<128x128xf32, #tpu.memory_space<vmem>>, vector<128x128xf32>
    tpu.vector_store %arg4[%c0_28, %c0_29], %24 {strides = array<i32>} : memref<128x128xf32, #tpu.memory_space<vmem>>, vector<128x128xf32>,
    %c0_30 = arith.constant 0 : index
    %c0_31 = arith.constant 0 : index
    %26 = vector.load %arg4[%c0_30, %c0_31] : memref<128x128xf32, #tpu.memory_space<vmem>>, vector<128x128xf32>
    %27 = arith.truncf %26 : vector<128x128xf32> to vector<128x128xbf16>
    %c2 = arith.constant 2 : index
    %c0_32 = arith.constant 0 : index
    %c0_33 = arith.constant 0 : index
    %28 = vector.load %arg1[%c2, %c0_32, %c0_33] : memref<7x128x128xbf16, #tpu.memory_space<vmem>>, vector<1x128x128xbf16>
    %29 = vector.shape_cast %28 : vector<1x128x128xbf16> to vector<128x128xbf16>
    %cst_34 = arith.constant dense<0.000000e+00> : vector<128x128xf32>
    %30 = tpu.matmul %27, %29, %cst_34 {dimension_numbers = #tpu.dot_dimension_numbers<[1], [0], [0], [1], [0, 0, 1, 1], [], []>} : vector<128x128xbf16>, vector<128x128xbf16>, vector<128x128xf32> -> vector<128x128xf32>
    %c0_35 = arith.constant 0 : index
    %c0_36 = arith.constant 0 : index
    %31 = vector.load %arg4[%c0_35, %c0_36] : memref<128x128xf32, #tpu.memory_space<vmem>>, vector<128x128xf32>
    tpu.vector_store %arg4[%c0_35, %c0_36], %30 {strides = array<i32>} : memref<128x128xf32, #tpu.memory_space<vmem>>, vector<128x128xf32>,
    %c0_37 = arith.constant 0 : index
    %c0_38 = arith.constant 0 : index
    %32 = vector.load %arg4[%c0_37, %c0_38] : memref<128x128xf32, #tpu.memory_space<vmem>>, vector<128x128xf32>
    %33 = arith.truncf %32 : vector<128x128xf32> to vector<128x128xbf16>
    %c1 = arith.constant 1 : index
    %c0_39 = arith.constant 0 : index
    %c0_40 = arith.constant 0 : index
    %34 = vector.load %arg1[%c1, %c0_39, %c0_40] : memref<7x128x128xbf16, #tpu.memory_space<vmem>>, vector<1x128x128xbf16>
    %35 = vector.shape_cast %34 : vector<1x128x128xbf16> to vector<128x128xbf16>
    %cst_41 = arith.constant dense<0.000000e+00> : vector<128x128xf32>
    %36 = tpu.matmul %33, %35, %cst_41 {dimension_numbers = #tpu.dot_dimension_numbers<[1], [0], [0], [1], [0, 0, 1, 1], [], []>} : vector<128x128xbf16>, vector<128x128xbf16>, vector<128x128xf32> -> vector<128x128xf32>
    %c0_42 = arith.constant 0 : index
    %c0_43 = arith.constant 0 : index
    %37 = vector.load %arg4[%c0_42, %c0_43] : memref<128x128xf32, #tpu.memory_space<vmem>>, vector<128x128xf32>
    tpu.vector_store %arg4[%c0_42, %c0_43], %36 {strides = array<i32>} : memref<128x128xf32, #tpu.memory_space<vmem>>, vector<128x128xf32>,
    %c0_44 = arith.constant 0 : index
    %c0_45 = arith.constant 0 : index
    %38 = vector.load %arg4[%c0_44, %c0_45] : memref<128x128xf32, #tpu.memory_space<vmem>>, vector<128x128xf32>
    %39 = arith.truncf %38 : vector<128x128xf32> to vector<128x128xbf16>
    %c0_46 = arith.constant 0 : index
    %c0_47 = arith.constant 0 : index
    %c0_48 = arith.constant 0 : index
    %40 = vector.load %arg1[%c0_46, %c0_47, %c0_48] : memref<7x128x128xbf16, #tpu.memory_space<vmem>>, vector<1x128x128xbf16>
    %41 = vector.shape_cast %40 : vector<1x128x128xbf16> to vector<128x128xbf16>
    %cst_49 = arith.constant dense<0.000000e+00> : vector<128x128xf32>
    %42 = tpu.matmul %39, %41, %cst_49 {dimension_numbers = #tpu.dot_dimension_numbers<[1], [0], [0], [1], [0, 0, 1, 1], [], []>} : vector<128x128xbf16>, vector<128x128xbf16>, vector<128x128xf32> -> vector<128x128xf32>
    %c0_50 = arith.constant 0 : index
    %c0_51 = arith.constant 0 : index
    %43 = vector.load %arg4[%c0_50, %c0_51] : memref<128x128xf32, #tpu.memory_space<vmem>>, vector<128x128xf32>
    tpu.vector_store %arg4[%c0_50, %c0_51], %42 {strides = array<i32>} : memref<128x128xf32, #tpu.memory_space<vmem>>, vector<128x128xf32>,
    %c0_52 = arith.constant 0 : index
    %c0_53 = arith.constant 0 : index
    %44 = vector.load %arg4[%c0_52, %c0_53] : memref<128x128xf32, #tpu.memory_space<vmem>>, vector<128x128xf32>
    %c0_54 = arith.constant 0 : index
    %c0_55 = arith.constant 0 : index
    %45 = vector.load %arg3[%c0_54, %c0_55] : memref<128x128xf32, #tpu.memory_space<vmem>>, vector<128x128xf32>
    tpu.vector_store %arg3[%c0_54, %c0_55], %44 {strides = array<i32>} : memref<128x128xf32, #tpu.memory_space<vmem>>, vector<128x128xf32>,
    return
  }
  func.func @transform_0(%arg0: i32) -> (i32, i32, i32) {
    %c0_i32 = arith.constant 0 : i32
    %c0_i32_0 = arith.constant 0 : i32
    %c0_i32_1 = arith.constant 0 : i32
    %c0_i32_2 = arith.constant 0 : i32
    return %c0_i32, %c0_i32_0, %c0_i32_1 : i32, i32, i32
  }
  func.func @transform_1(%arg0: i32) -> (i32, i32) {
    %c0_i32 = arith.constant 0 : i32
    %c0_i32_0 = arith.constant 0 : i32
    return %arg0, %c0_i32 : i32, i32
  }
  func.func @transform_2(%arg0: i32) -> (i32, i32) {
    %c0_i32 = arith.constant 0 : i32
    %c0_i32_0 = arith.constant 0 : i32
    return %arg0, %c0_i32 : i32, i32
  }
}

</mosaic_0001>

<llo_original>
// kernel: tpu_custom_call.1
$region0: #{tpu_custom_call.1}
  #allocation0 [shape = 'u32[]', space=smem, size = 0x4, offset = 0x4, fixed_abs, tag = 'smem constant byte address 0x4 - core index']
  #allocation1 [shape = 'u32[144,128]{1,0:T(1,128)}', space=vmem, size = 0x12000, scoped, tag = 'internal scratch']
  #allocation2 [shape = 'f32[128,128]{1,0:T(8,128)}', space=vmem, size = 0x10000, scoped, tag = 'scratch operand']
  %s0 = inlined_call_operand.hbm [shape: bf16[7,128,128], index: 0, kind: input, shape index: {}]
  %s1 = inlined_call_operand.hbm [shape: f32[256,128], index: 1, kind: input, shape index: {}]
  %s2 = inlined_call_operand.hbm [shape: f32[256,128], index: 2, kind: output, shape index: {}]
  %s3 = sld [smem:[#allocation0]]
  $region49: #{tpu_custom_call.1} parent=0
    _
  %s5 = ssub.s32 1, %s3
  %s6 = scalar_select 0, %s5, %s3
  $region1: #{tpu_custom_call.1} parent=0
    #allocation3 [shape = 'u8[229376]{0}', space=vmem, size = 0x38000, scoped, tag = 'input window, operand 0, single buffered']
    #allocation4 [shape = 's32[2]{0}', space=sflag, size = 0x8, scoped, tag = 'scoped memory for tpu_custom_call.1']
    #allocation5 [shape = 's32[2]{0}', space=sflag, size = 0x8, scoped, tag = 'scoped memory for tpu_custom_call.1']
    #allocation6 [shape = 'u8[131072]{0}', space=vmem, size = 0x20000, scoped, tag = 'input window, operand 1']
    #allocation7 [shape = 's32[2]{0}', space=sflag, size = 0x8, scoped, tag = 'scoped memory for tpu_custom_call.1']
    #allocation8 [shape = 'u8[131072]{0}', space=vmem, size = 0x20000, scoped, tag = 'output window, operand 0']
    %7 = vsyncpa [#allocation4], 0
    %8 = vsyncpa [#allocation7], 0
    %s9 = scalar_lea.sflag [#allocation7], 1
    %10 = vsyncpa %s9, 0
    %11 = vsyncpa [#allocation5], 0
    %s12 = scalar_lea.sflag [#allocation5], 1
    %13 = vsyncpa %s12, 0
    loop: start=0, step=1, limit=4
    $region2: #{tpu_custom_call.1} parent=1 // loop_pre_header
      _
    $region3: #{tpu_custom_call.1} parent=1 // loop_header
      %s15 = sphi 0, %s19
      %p16 = scmp.ge.s32.totalorder %s15, 4
      %s23 = sphi 0, %s23
      %s25 = sphi 0, %s23
      %s26 = sphi 0, %s25
      %s40 = sphi 0, %s26
      %s46 = sphi 0, %s48
      %s49 = sphi 0, %s46
      %s50 = sphi 0, %s49
      %s66 = sphi 0, %s50
      %s72 = sphi 0, %s74
      %s75 = sphi 0, %s72
      %s76 = sphi 0, %s75
      %s92 = sphi 0, %s76
    $region4: #{tpu_custom_call.1} parent=1 // loop_header_branch
      %18 = sbr.rel (%p16) target = $region8
    $region5: #{tpu_custom_call.1} parent=1 // loop_body
      %s20 = ssub.s32 %s15, 1
      %s21 = ssub.s32 %s15, 2
      %s22 = sadd.s32 %s15, 1
      %s24 = sadd.s32 %s23, 1
      %p27 = scmp.eq.s32.totalorder %s15, 1
      %p28 = scmp.ne.s32.totalorder %s23, %s25
      %p29 = scmp.eq.s32.totalorder %s15, 0
      %p30 = por %p28, %p29
      %p31 = scmp.ne.s32.totalorder %s23, %s25
      %p32 = scmp.eq.s32.totalorder %s20, 1
      %p33 = por %p31, %p32
      %p34 = scmp.ne.s32.totalorder %s25, %s26
      %p35 = scmp.eq.s32.totalorder %s20, 0
      %p36 = por %p34, %p35
      %p37 = scmp.ne.s32.totalorder %s25, %s26
      %p38 = scmp.eq.s32.totalorder %s21, 1
      %p39 = por %p37, %p38
      %p41 = scmp.ne.s32.totalorder %s26, %s40
      %p42 = scmp.eq.s32.totalorder %s21, 0
      %p43 = por %p41, %p42
      %s44 = ssub.s32 %s15, %s22
      %p45 = scmp.eq.s32.totalorder %s44, 0
      %s47 = sadd.s32 %s46, 1
      %s48 = scalar_select %p45, %s46, %s47
      %p51 = pneg %p45
      %p52 = scmp.eq.s32.totalorder %s15, 1
      %p53 = por %p51, %p52
      %p54 = scmp.ne.s32.totalorder %s46, %s49
      %p55 = scmp.eq.s32.totalorder %s15, 0
      %p56 = por %p54, %p55
      %p57 = scmp.ne.s32.totalorder %s46, %s49
      %p58 = scmp.eq.s32.totalorder %s20, 1
      %p59 = por %p57, %p58
      %p60 = scmp.ne.s32.totalorder %s49, %s50
      %p61 = scmp.eq.s32.totalorder %s20, 0
      %p62 = por %p60, %p61
      %p63 = scmp.ne.s32.totalorder %s49, %s50
      %p64 = scmp.eq.s32.totalorder %s21, 1
      %p65 = por %p63, %p64
      %p67 = scmp.ne.s32.totalorder %s50, %s66
      %p68 = scmp.eq.s32.totalorder %s21, 0
      %p69 = por %p67, %p68
      %s70 = ssub.s32 %s15, %s22
      %p71 = scmp.eq.s32.totalorder %s70, 0
      %s73 = sadd.s32 %s72, 1
      %s74 = scalar_select %p71, %s72, %s73
      %p77 = pneg %p71
      %p78 = scmp.eq.s32.totalorder %s15, 1
      %p79 = por %p77, %p78
      %p80 = scmp.ne.s32.totalorder %s72, %s75
      %p81 = scmp.eq.s32.totalorder %s15, 0
      %p82 = por %p80, %p81
      %p83 = scmp.ne.s32.totalorder %s72, %s75
      %p84 = scmp.eq.s32.totalorder %s20, 1
      %p85 = por %p83, %p84
      %p86 = scmp.ne.s32.totalorder %s75, %s76
      %p87 = scmp.eq.s32.totalorder %s20, 0
      %p88 = por %p86, %p87
      %p89 = scmp.ne.s32.totalorder %s75, %s76
      %p90 = scmp.eq.s32.totalorder %s21, 1
      %p91 = por %p89, %p90
      %p93 = scmp.ne.s32.totalorder %s76, %s92
      %p94 = scmp.eq.s32.totalorder %s21, 0
      %p95 = por %p93, %p94
      %p96 = scmp.le.s32.totalorder 1, %s15
      %p97 = scmp.lt.s32.totalorder %s15, 3
      %p98 = pnand %p96, %p97
      %p99 = pneg %p98
      // Predicated region
      $region9: #{tpu_custom_call.1} parent=5 // pred_check
        _
      $region10: #{tpu_custom_call.1} parent=5 // pred_check_branch
        %101 = sbr.rel (%p98) target = $region12
      $region11: #{tpu_custom_call.1} parent=5 // pred_region
        %s102 = ssub.s32 %s15, 1
        // Predicated region
        $region13: #{tpu_custom_call.1} parent=11 // pred_check
          %p103 = pneg %p36
        $region14: #{tpu_custom_call.1} parent=11 // pred_check_branch
          %105 = sbr.rel (%p103) target = $region16
        $region15: #{tpu_custom_call.1} parent=11 // pred_region
          %s107 = ssub.s32 7168, 7168
          %108 = vsyncadd [#allocation4], %s107
          %s109 = sshll.u32 [#allocation3], 4
          %s110 = int_to_ptr.vmem [resolvable:$true] %s109
          %115 = dma.hbm_to_vmem [thread:$0]  %s0, 7168, %s110, [#allocation4], 64, 64, 4
        $region16: #{tpu_custom_call.1} parent=11 // pred_fallthru
          _
      $region12: #{tpu_custom_call.1} parent=5 // pred_fallthru
        _
      %p116 = scmp.lt.s32.totalorder %s15, 2
      // Predicated region
      $region17: #{tpu_custom_call.1} parent=5 // pred_check
        %p117 = pneg %p116
      $region18: #{tpu_custom_call.1} parent=5 // pred_check_branch
        %119 = sbr.rel (%p117) target = $region20
      $region19: #{tpu_custom_call.1} parent=5 // pred_region
        // Predicated region
        $region21: #{tpu_custom_call.1} parent=19 // pred_check
          %p120 = pneg %p56
        $region22: #{tpu_custom_call.1} parent=19 // pred_check_branch
          %122 = sbr.rel (%p120) target = $region24
        $region23: #{tpu_custom_call.1} parent=19 // pred_region
          %s123 = sand.u32 %s46, 1
          %s124 = scalar_lea.sflag [#allocation7], %s123
          %s125 = sand.u32 %s46, 1
          %s126 = smul.addr %s125, 128
          %s127 = scalar_lea.vmem [#allocation6], %s126
          %s128 = smul.u32 16, %s15
          %s130 = ssub.s32 2048, 2048
          %131 = vsyncadd %s124, %s130
          %s132 = smul.addr %s128, 128
          %s133 = scalar_lea.hbm %s1, %s132
          %s134 = sshll.u32 %s127, 4
          %s135 = int_to_ptr.vmem [resolvable:$true] %s134
          %140 = dma.hbm_to_vmem [thread:$0]  %s133, 2048, %s135, %s124, 128, 128, 8
        $region24: #{tpu_custom_call.1} parent=19 // pred_fallthru
          _
      $region20: #{tpu_custom_call.1} parent=5 // pred_fallthru
        _
      %p141 = scmp.le.s32.totalorder 1, %s15
      %p142 = scmp.lt.s32.totalorder %s15, 3
      %p143 = pnand %p141, %p142
      %p144 = pneg %p143
      // Predicated region
      $region25: #{tpu_custom_call.1} parent=5 // pred_check
        _
      $region26: #{tpu_custom_call.1} parent=5 // pred_check_branch
        %146 = sbr.rel (%p143) target = $region28
      $region27: #{tpu_custom_call.1} parent=5 // pred_region
        %s147 = ssub.s32 %s15, 1
        // Predicated region
        $region29: #{tpu_custom_call.1} parent=27 // pred_check
          %p148 = pneg %p36
        $region30: #{tpu_custom_call.1} parent=27 // pred_check_branch
          %150 = sbr.rel (%p148) target = $region32
        $region31: #{tpu_custom_call.1} parent=27 // pred_region
          %151 = dma.done [#allocation4], 7168
        $region32: #{tpu_custom_call.1} parent=27 // pred_fallthru
          _
        %s152 = sand.u32 %s49, 1
        %s153 = scalar_lea.sflag [#allocation7], %s152
        %s154 = sand.u32 %s49, 1
        %s155 = smul.addr %s154, 128
        %s156 = scalar_lea.vmem [#allocation6], %s155
        // Predicated region
        $region33: #{tpu_custom_call.1} parent=27 // pred_check
          %p157 = pneg %p62
        $region34: #{tpu_custom_call.1} parent=27 // pred_check_branch
          %159 = sbr.rel (%p157) target = $region36
        $region35: #{tpu_custom_call.1} parent=27 // pred_region
          %160 = dma.done %s153, 2048
        $region36: #{tpu_custom_call.1} parent=27 // pred_fallthru
          _
        %p161 = pneg %p36
        %p162 = pneg %p33
        %s163 = sand.u32 %s49, 1
        %s164 = scalar_lea.sflag [#allocation7], %s163
        %s165 = sand.u32 %s49, 1
        %s166 = smul.addr %s165, 128
        %s167 = scalar_lea.vmem [#allocation6], %s166
        %p168 = pneg %p62
        %p169 = pneg %p59
        %p170 = pneg %p88
        %p171 = pneg %p85
        %s172 = sand.u32 %s75, 1
        %s173 = scalar_lea.sflag [#allocation5], %s172
        %s174 = sand.u32 %s75, 1
        %s175 = smul.addr %s174, 128
        %s176 = scalar_lea.vmem [#allocation8], %s175
        %s177 = smul.u32 16, %s20
        %s178 = smul.u32 16, %s20
        %v180 = vld [vmem:[%s156] sm:$0xff]
        %v181 = vld [vmem:[%s156 + $0x8] sm:$0xff]
        %v182 = vld [vmem:[%s156 + $0x10] sm:$0xff]
        %v183 = vld [vmem:[%s156 + $0x18] sm:$0xff]
        %v184 = vld [vmem:[%s156 + $0x20] sm:$0xff]
        %v185 = vld [vmem:[%s156 + $0x28] sm:$0xff]
        %v186 = vld [vmem:[%s156 + $0x30] sm:$0xff]
        %v187 = vld [vmem:[%s156 + $0x38] sm:$0xff]
        %v188 = vld [vmem:[%s156 + $0x40] sm:$0xff]
        %v189 = vld [vmem:[%s156 + $0x48] sm:$0xff]
        %v190 = vld [vmem:[%s156 + $0x50] sm:$0xff]
        %v191 = vld [vmem:[%s156 + $0x58] sm:$0xff]
        %v192 = vld [vmem:[%s156 + $0x60] sm:$0xff]
        %v193 = vld [vmem:[%s156 + $0x68] sm:$0xff]
        %v194 = vld [vmem:[%s156 + $0x70] sm:$0xff]
        %v195 = vld [vmem:[%s156 + $0x78] sm:$0xff]
        %196 = vst [vmem:[#allocation2] sm:$0xff] %v180
        %197 = vst [vmem:[#allocation2 + $0x8] sm:$0xff] %v181
        %198 = vst [vmem:[#allocation2 + $0x10] sm:$0xff] %v182
        %199 = vst [vmem:[#allocation2 + $0x18] sm:$0xff] %v183
        %200 = vst [vmem:[#allocation2 + $0x20] sm:$0xff] %v184
        %201 = vst [vmem:[#allocation2 + $0x28] sm:$0xff] %v185
        %202 = vst [vmem:[#allocation2 + $0x30] sm:$0xff] %v186
        %203 = vst [vmem:[#allocation2 + $0x38] sm:$0xff] %v187
        %204 = vst [vmem:[#allocation2 + $0x40] sm:$0xff] %v188
        %205 = vst [vmem:[#allocation2 + $0x48] sm:$0xff] %v189
        %206 = vst [vmem:[#allocation2 + $0x50] sm:$0xff] %v190
        %207 = vst [vmem:[#allocation2 + $0x58] sm:$0xff] %v191
        %208 = vst [vmem:[#allocation2 + $0x60] sm:$0xff] %v192
        %209 = vst [vmem:[#allocation2 + $0x68] sm:$0xff] %v193
        %210 = vst [vmem:[#allocation2 + $0x70] sm:$0xff] %v194
        %211 = vst [vmem:[#allocation2 + $0x78] sm:$0xff] %v195
        %v212 = vld [vmem:[#allocation2] sm:$0xff]
        %v213 = vld [vmem:[#allocation2 + $0x8] sm:$0xff]
        %v214 = vld [vmem:[#allocation2 + $0x10] sm:$0xff]
        %v215 = vld [vmem:[#allocation2 + $0x18] sm:$0xff]
        %v216 = vld [vmem:[#allocation2 + $0x20] sm:$0xff]
        %v217 = vld [vmem:[#allocation2 + $0x28] sm:$0xff]
        %v218 = vld [vmem:[#allocation2 + $0x30] sm:$0xff]
        %v219 = vld [vmem:[#allocation2 + $0x38] sm:$0xff]
        %v220 = vld [vmem:[#allocation2 + $0x40] sm:$0xff]
        %v221 = vld [vmem:[#allocation2 + $0x48] sm:$0xff]
        %v222 = vld [vmem:[#allocation2 + $0x50] sm:$0xff]
        %v223 = vld [vmem:[#allocation2 + $0x58] sm:$0xff]
        %v224 = vld [vmem:[#allocation2 + $0x60] sm:$0xff]
        %v225 = vld [vmem:[#allocation2 + $0x68] sm:$0xff]
        %v226 = vld [vmem:[#allocation2 + $0x70] sm:$0xff]
        %v227 = vld [vmem:[#allocation2 + $0x78] sm:$0xff]
        %v228 = vpack.c.bf16 %v213, %v212
        %v229 = vpack.c.bf16 %v215, %v214
        %v230 = vpack.c.bf16 %v217, %v216
        %v231 = vpack.c.bf16 %v219, %v218
        %v232 = vpack.c.bf16 %v221, %v220
        %v233 = vpack.c.bf16 %v223, %v222
        %v234 = vpack.c.bf16 %v225, %v224
        %v235 = vpack.c.bf16 %v227, %v226
        %s236 = scalar_lea.vmem [#allocation3], 384
        %v237 = vld [vmem:[%s236] sm:$0xf]
        %v238 = vld [vmem:[%s236 + $0x4] sm:$0xf]
        %v239 = vld [vmem:[%s236 + $0x8] sm:$0xf]
        %v240 = vld [vmem:[%s236 + $0xc] sm:$0xf]
        %v241 = vld [vmem:[%s236 + $0x10] sm:$0xf]
        %v242 = vld [vmem:[%s236 + $0x14] sm:$0xf]
        %v243 = vld [vmem:[%s236 + $0x18] sm:$0xf]
        %v244 = vld [vmem:[%s236 + $0x1c] sm:$0xf]
        %v245 = vld [vmem:[%s236 + $0x20] sm:$0xf]
        %v246 = vld [vmem:[%s236 + $0x24] sm:$0xf]
        %v247 = vld [vmem:[%s236 + $0x28] sm:$0xf]
        %v248 = vld [vmem:[%s236 + $0x2c] sm:$0xf]
        %v249 = vld [vmem:[%s236 + $0x30] sm:$0xf]
        %v250 = vld [vmem:[%s236 + $0x34] sm:$0xf]
        %v251 = vld [vmem:[%s236 + $0x38] sm:$0xf]
        %v252 = vld [vmem:[%s236 + $0x3c] sm:$0xf]
        %v269 = vunpack.c.l.b16 %v237
        %v270 = vunpack.c.l.b16 %v238
        %v271 = vunpack.c.l.b16 %v239
        %v272 = vunpack.c.l.b16 %v240
        %v273 = vunpack.c.l.b16 %v241
        %v274 = vunpack.c.l.b16 %v242
        %v275 = vunpack.c.l.b16 %v243
        %v276 = vunpack.c.l.b16 %v244
        %v277 = vunpack.c.l.b16 %v245
        %v278 = vunpack.c.l.b16 %v246
        %v279 = vunpack.c.l.b16 %v247
        %v280 = vunpack.c.l.b16 %v248
        %v281 = vunpack.c.l.b16 %v249
        %v282 = vunpack.c.l.b16 %v250
        %v283 = vunpack.c.l.b16 %v251
        %v284 = vunpack.c.l.b16 %v252
        %v285 = vpack.c.b16 %v270, %v269
        %v286 = vpack.c.b16 %v272, %v271
        %v287 = vpack.c.b16 %v274, %v273
        %v288 = vpack.c.b16 %v276, %v275
        %v289 = vpack.c.b16 %v278, %v277
        %v290 = vpack.c.b16 %v280, %v279
        %v291 = vpack.c.b16 %v282, %v281
        %v292 = vpack.c.b16 %v284, %v283
        %301 = vmatprep.subr.bf16.mxu0 0
        %302 = vmatpush1.bf16.msra.mxu0 %v285
        %303 = vmatprep.subr.bf16.mxu0 0
        %304 = vmatpush1.bf16.msra.mxu0 %v286
        %305 = vmatprep.subr.bf16.mxu0 0
        %306 = vmatpush1.bf16.msra.mxu0 %v287
        %307 = vmatprep.subr.bf16.mxu0 0
        %308 = vmatpush1.bf16.msra.mxu0 %v288
        %309 = vmatprep.subr.bf16.mxu0 0
        %310 = vmatpush1.bf16.msra.mxu0 %v289
        %311 = vmatprep.subr.bf16.mxu0 0
        %312 = vmatpush1.bf16.msra.mxu0 %v290
        %313 = vmatprep.subr.bf16.mxu0 0
        %314 = vmatpush1.bf16.msra.mxu0 %v291
        %315 = vmatprep.subr.bf16.mxu0 0
        %316 = vmatpush1.bf16.msra.mxu0 %v292
        %317 = vmatprep.subr.bf16.mxu0 0
        %318 = vmatpush1.bf16.msra.mxu0 0
        %319 = vmatprep.subr.bf16.mxu0 0
        %320 = vmatpush1.bf16.msra.mxu0 0
        %321 = vmatprep.subr.bf16.mxu0 0
        %322 = vmatpush1.bf16.msra.mxu0 0
        %323 = vmatprep.subr.bf16.mxu0 0
        %324 = vmatpush1.bf16.msra.mxu0 0
        %325 = vmatprep.subr.bf16.mxu0 0
        %326 = vmatpush1.bf16.msra.mxu0 0
        %327 = vmatprep.subr.bf16.mxu0 0
        %328 = vmatpush1.bf16.msra.mxu0 0
        %329 = vmatprep.subr.bf16.mxu0 0
        %330 = vmatpush1.bf16.msra.mxu0 0
        %331 = vmatprep.subr.bf16.mxu0 0
        %332 = vmatpush1.bf16.msra.mxu0 0
        %333 = vmatprep.mubr.bf16.mxu0 0
        %334 = vmatmul.mubr.bf16.gmra.mrb[0].mxu0 %v228
        %v335 = vpop.f32.mrb[0].mxu0
        %v336 = vadd.f32 0.0, %v335
        %v337 = vpop.f32.mrb[0].mxu0
        %v338 = vpop.f32.mrb[0].mxu0
        %v339 = vadd.f32 0.0, %v338
        %v340 = vpop.f32.mrb[0].mxu0
        %341 = vmatprep.mubr.bf16.mxu0 0
        %342 = vmatmul.mubr.bf16.gmra.mrb[0].mxu0 %v229
        %v343 = vpop.f32.mrb[0].mxu0
        %v344 = vadd.f32 0.0, %v343
        %v345 = vpop.f32.mrb[0].mxu0
        %v346 = vpop.f32.mrb[0].mxu0
        %v347 = vadd.f32 0.0, %v346
        %v348 = vpop.f32.mrb[0].mxu0
        %349 = vmatprep.mubr.bf16.mxu0 0
        %350 = vmatmul.mubr.bf16.gmra.mrb[0].mxu0 %v230
        %v351 = vpop.f32.mrb[0].mxu0
        %v352 = vadd.f32 0.0, %v351
        %v353 = vpop.f32.mrb[0].mxu0
        %v354 = vpop.f32.mrb[0].mxu0
        %v355 = vadd.f32 0.0, %v354
        %v356 = vpop.f32.mrb[0].mxu0
        %357 = vmatprep.mubr.bf16.mxu0 0
        %358 = vmatmul.mubr.bf16.gmra.mrb[0].mxu0 %v231
        %v359 = vpop.f32.mrb[0].mxu0
        %v360 = vadd.f32 0.0, %v359
        %v361 = vpop.f32.mrb[0].mxu0
        %v362 = vpop.f32.mrb[0].mxu0
        %v363 = vadd.f32 0.0, %v362
        %v364 = vpop.f32.mrb[0].mxu0
        %365 = vmatprep.mubr.bf16.mxu0 0
        %366 = vmatmul.mubr.bf16.gmra.mrb[0].mxu0 %v232
        %v367 = vpop.f32.mrb[0].mxu0
        %v368 = vadd.f32 0.0, %v367
        %v369 = vpop.f32.mrb[0].mxu0
        %v370 = vpop.f32.mrb[0].mxu0
        %v371 = vadd.f32 0.0, %v370
        %v372 = vpop.f32.mrb[0].mxu0
        %373 = vmatprep.mubr.bf16.mxu0 0
        %374 = vmatmul.mubr.bf16.gmra.mrb[0].mxu0 %v233
        %v375 = vpop.f32.mrb[0].mxu0
        %v376 = vadd.f32 0.0, %v375
        %v377 = vpop.f32.mrb[0].mxu0
        %v378 = vpop.f32.mrb[0].mxu0
        %v379 = vadd.f32 0.0, %v378
        %v380 = vpop.f32.mrb[0].mxu0
        %381 = vmatprep.mubr.bf16.mxu0 0
        %382 = vmatmul.mubr.bf16.gmra.mrb[0].mxu0 %v234
        %v383 = vpop.f32.mrb[0].mxu0
        %v384 = vadd.f32 0.0, %v383
        %v385 = vpop.f32.mrb[0].mxu0
        %v386 = vpop.f32.mrb[0].mxu0
        %v387 = vadd.f32 0.0, %v386
        %v388 = vpop.f32.mrb[0].mxu0
        %389 = vmatprep.mubr.bf16.mxu0 0
        %390 = vmatmul.mubr.bf16.gmra.mrb[0].mxu0 %v235
        %v391 = vpop.f32.mrb[0].mxu0
        %v392 = vadd.f32 0.0, %v391
        %v393 = vpop.f32.mrb[0].mxu0
        %v394 = vpop.f32.mrb[0].mxu0
        %v395 = vadd.f32 0.0, %v394
        %v396 = vpop.f32.mrb[0].mxu0
        %397 = vdwg.mxu0
        %398 = vst [vmem:[#allocation2] sm:$0xff] %v336
        %399 = vst [vmem:[#allocation2 + $0x8] sm:$0xff] %v339
        %400 = vst [vmem:[#allocation2 + $0x10] sm:$0xff] %v344
        %401 = vst [vmem:[#allocation2 + $0x18] sm:$0xff] %v347
        %402 = vst [vmem:[#allocation2 + $0x20] sm:$0xff] %v352
        %403 = vst [vmem:[#allocation2 + $0x28] sm:$0xff] %v355
        %404 = vst [vmem:[#allocation2 + $0x30] sm:$0xff] %v360
        %405 = vst [vmem:[#allocation2 + $0x38] sm:$0xff] %v363
        %406 = vst [vmem:[#allocation2 + $0x40] sm:$0xff] %v368
        %407 = vst [vmem:[#allocation2 + $0x48] sm:$0xff] %v371
        %408 = vst [vmem:[#allocation2 + $0x50] sm:$0xff] %v376
        %409 = vst [vmem:[#allocation2 + $0x58] sm:$0xff] %v379
        %410 = vst [vmem:[#allocation2 + $0x60] sm:$0xff] %v384
        %411 = vst [vmem:[#allocation2 + $0x68] sm:$0xff] %v387
        %412 = vst [vmem:[#allocation2 + $0x70] sm:$0xff] %v392
        %413 = vst [vmem:[#allocation2 + $0x78] sm:$0xff] %v395
        %v414 = vld [vmem:[#allocation2] sm:$0xff]
        %v415 = vld [vmem:[#allocation2 + $0x8] sm:$0xff]
        %v416 = vld [vmem:[#allocation2 + $0x10] sm:$0xff]
        %v417 = vld [vmem:[#allocation2 + $0x18] sm:$0xff]
        %v418 = vld [vmem:[#allocation2 + $0x20] sm:$0xff]
        %v419 = vld [vmem:[#allocation2 + $0x28] sm:$0xff]
        %v420 = vld [vmem:[#allocation2 + $0x30] sm:$0xff]
        %v421 = vld [vmem:[#allocation2 + $0x38] sm:$0xff]
        %v422 = vld [vmem:[#allocation2 + $0x40] sm:$0xff]
        %v423 = vld [vmem:[#allocation2 + $0x48] sm:$0xff]
        %v424 = vld [vmem:[#allocation2 + $0x50] sm:$0xff]
        %v425 = vld [vmem:[#allocation2 + $0x58] sm:$0xff]
        %v426 = vld [vmem:[#allocation2 + $0x60] sm:$0xff]
        %v427 = vld [vmem:[#allocation2 + $0x68] sm:$0xff]
        %v428 = vld [vmem:[#allocation2 + $0x70] sm:$0xff]
        %v429 = vld [vmem:[#allocation2 + $0x78] sm:$0xff]
        %v430 = vpack.c.bf16 %v415, %v414
        %v431 = vpack.c.bf16 %v417, %v416
        %v432 = vpack.c.bf16 %v419, %v418
        %v433 = vpack.c.bf16 %v421, %v420
        %v434 = vpack.c.bf16 %v423, %v422
        %v435 = vpack.c.bf16 %v425, %v424
        %v436 = vpack.c.bf16 %v427, %v426
        %v437 = vpack.c.bf16 %v429, %v428
        %s438 = scalar_lea.vmem [#allocation3], 320
        %v439 = vld [vmem:[%s438] sm:$0xf]
        %v440 = vld [vmem:[%s438 + $0x4] sm:$0xf]
        %v441 = vld [vmem:[%s438 + $0x8] sm:$0xf]
        %v442 = vld [vmem:[%s438 + $0xc] sm:$0xf]
        %v443 = vld [vmem:[%s438 + $0x10] sm:$0xf]
        %v444 = vld [vmem:[%s438 + $0x14] sm:$0xf]
        %v445 = vld [vmem:[%s438 + $0x18] sm:$0xf]
        %v446 = vld [vmem:[%s438 + $0x1c] sm:$0xf]
        %v447 = vld [vmem:[%s438 + $0x20] sm:$0xf]
        %v448 = vld [vmem:[%s438 + $0x24] sm:$0xf]
        %v449 = vld [vmem:[%s438 + $0x28] sm:$0xf]
        %v450 = vld [vmem:[%s438 + $0x2c] sm:$0xf]
        %v451 = vld [vmem:[%s438 + $0x30] sm:$0xf]
        %v452 = vld [vmem:[%s438 + $0x34] sm:$0xf]
        %v453 = vld [vmem:[%s438 + $0x38] sm:$0xf]
        %v454 = vld [vmem:[%s438 + $0x3c] sm:$0xf]
        %v471 = vunpack.c.l.b16 %v439
        %v472 = vunpack.c.l.b16 %v440
        %v473 = vunpack.c.l.b16 %v441
        %v474 = vunpack.c.l.b16 %v442
        %v475 = vunpack.c.l.b16 %v443
        %v476 = vunpack.c.l.b16 %v444
        %v477 = vunpack.c.l.b16 %v445
        %v478 = vunpack.c.l.b16 %v446
        %v479 = vunpack.c.l.b16 %v447
        %v480 = vunpack.c.l.b16 %v448
        %v481 = vunpack.c.l.b16 %v449
        %v482 = vunpack.c.l.b16 %v450
        %v483 = vunpack.c.l.b16 %v451
        %v484 = vunpack.c.l.b16 %v452
        %v485 = vunpack.c.l.b16 %v453
        %v486 = vunpack.c.l.b16 %v454
        %v487 = vpack.c.b16 %v472, %v471
        %v488 = vpack.c.b16 %v474, %v473
        %v489 = vpack.c.b16 %v476, %v475
        %v490 = vpack.c.b16 %v478, %v477
        %v491 = vpack.c.b16 %v480, %v479
        %v492 = vpack.c.b16 %v482, %v481
        %v493 = vpack.c.b16 %v484, %v483
        %v494 = vpack.c.b16 %v486, %v485
        %503 = vmatprep.subr.bf16.mxu0 0
        %504 = vmatpush1.bf16.msra.mxu0 %v487
        %505 = vmatprep.subr.bf16.mxu0 0
        %506 = vmatpush1.bf16.msra.mxu0 %v488
        %507 = vmatprep.subr.bf16.mxu0 0
        %508 = vmatpush1.bf16.msra.mxu0 %v489
        %509 = vmatprep.subr.bf16.mxu0 0
        %510 = vmatpush1.bf16.msra.mxu0 %v490
        %511 = vmatprep.subr.bf16.mxu0 0
        %512 = vmatpush1.bf16.msra.mxu0 %v491
        %513 = vmatprep.subr.bf16.mxu0 0
        %514 = vmatpush1.bf16.msra.mxu0 %v492
        %515 = vmatprep.subr.bf16.mxu0 0
        %516 = vmatpush1.bf16.msra.mxu0 %v493
        %517 = vmatprep.subr.bf16.mxu0 0
        %518 = vmatpush1.bf16.msra.mxu0 %v494
        %519 = vmatprep.subr.bf16.mxu0 0
        %520 = vmatpush1.bf16.msra.mxu0 0
        %521 = vmatprep.subr.bf16.mxu0 0
        %522 = vmatpush1.bf16.msra.mxu0 0
        %523 = vmatprep.subr.bf16.mxu0 0
        %524 = vmatpush1.bf16.msra.mxu0 0
        %525 = vmatprep.subr.bf16.mxu0 0
        %526 = vmatpush1.bf16.msra.mxu0 0
        %527 = vmatprep.subr.bf16.mxu0 0
        %528 = vmatpush1.bf16.msra.mxu0 0
        %529 = vmatprep.subr.bf16.mxu0 0
        %530 = vmatpush1.bf16.msra.mxu0 0
        %531 = vmatprep.subr.bf16.mxu0 0
        %532 = vmatpush1.bf16.msra.mxu0 0
        %533 = vmatprep.subr.bf16.mxu0 0
        %534 = vmatpush1.bf16.msra.mxu0 0
        %535 = vmatprep.mubr.bf16.mxu0 0
        %536 = vmatmul.mubr.bf16.gmra.mrb[0].mxu0 %v430
        %v537 = vpop.f32.mrb[0].mxu0
        %v538 = vadd.f32 0.0, %v537
        %v539 = vpop.f32.mrb[0].mxu0
        %v540 = vpop.f32.mrb[0].mxu0
        %v541 = vadd.f32 0.0, %v540
        %v542 = vpop.f32.mrb[0].mxu0
        %543 = vmatprep.mubr.bf16.mxu0 0
        %544 = vmatmul.mubr.bf16.gmra.mrb[0].mxu0 %v431
        %v545 = vpop.f32.mrb[0].mxu0
        %v546 = vadd.f32 0.0, %v545
        %v547 = vpop.f32.mrb[0].mxu0
        %v548 = vpop.f32.mrb[0].mxu0
        %v549 = vadd.f32 0.0, %v548
        %v550 = vpop.f32.mrb[0].mxu0
        %551 = vmatprep.mubr.bf16.mxu0 0
        %552 = vmatmul.mubr.bf16.gmra.mrb[0].mxu0 %v432
        %v553 = vpop.f32.mrb[0].mxu0
        %v554 = vadd.f32 0.0, %v553
        %v555 = vpop.f32.mrb[0].mxu0
        %v556 = vpop.f32.mrb[0].mxu0
        %v557 = vadd.f32 0.0, %v556
        %v558 = vpop.f32.mrb[0].mxu0
        %559 = vmatprep.mubr.bf16.mxu0 0
        %560 = vmatmul.mubr.bf16.gmra.mrb[0].mxu0 %v433
        %v561 = vpop.f32.mrb[0].mxu0
        %v562 = vadd.f32 0.0, %v561
        %v563 = vpop.f32.mrb[0].mxu0
        %v564 = vpop.f32.mrb[0].mxu0
        %v565 = vadd.f32 0.0, %v564
        %v566 = vpop.f32.mrb[0].mxu0
        %567 = vmatprep.mubr.bf16.mxu0 0
        %568 = vmatmul.mubr.bf16.gmra.mrb[0].mxu0 %v434
        %v569 = vpop.f32.mrb[0].mxu0
        %v570 = vadd.f32 0.0, %v569
        %v571 = vpop.f32.mrb[0].mxu0
        %v572 = vpop.f32.mrb[0].mxu0
        %v573 = vadd.f32 0.0, %v572
        %v574 = vpop.f32.mrb[0].mxu0
        %575 = vmatprep.mubr.bf16.mxu0 0
        %576 = vmatmul.mubr.bf16.gmra.mrb[0].mxu0 %v435
        %v577 = vpop.f32.mrb[0].mxu0
        %v578 = vadd.f32 0.0, %v577
        %v579 = vpop.f32.mrb[0].mxu0
        %v580 = vpop.f32.mrb[0].mxu0
        %v581 = vadd.f32 0.0, %v580
        %v582 = vpop.f32.mrb[0].mxu0
        %583 = vmatprep.mubr.bf16.mxu0 0
        %584 = vmatmul.mubr.bf16.gmra.mrb[0].mxu0 %v436
        %v585 = vpop.f32.mrb[0].mxu0
        %v586 = vadd.f32 0.0, %v585
        %v587 = vpop.f32.mrb[0].mxu0
        %v588 = vpop.f32.mrb[0].mxu0
        %v589 = vadd.f32 0.0, %v588
        %v590 = vpop.f32.mrb[0].mxu0
        %591 = vmatprep.mubr.bf16.mxu0 0
        %592 = vmatmul.mubr.bf16.gmra.mrb[0].mxu0 %v437
        %v593 = vpop.f32.mrb[0].mxu0
        %v594 = vadd.f32 0.0, %v593
        %v595 = vpop.f32.mrb[0].mxu0
        %v596 = vpop.f32.mrb[0].mxu0
        %v597 = vadd.f32 0.0, %v596
        %v598 = vpop.f32.mrb[0].mxu0
        %599 = vdwg.mxu0
        %600 = vst [vmem:[#allocation2] sm:$0xff] %v538
        %601 = vst [vmem:[#allocation2 + $0x8] sm:$0xff] %v541
        %602 = vst [vmem:[#allocation2 + $0x10] sm:$0xff] %v546
        %603 = vst [vmem:[#allocation2 + $0x18] sm:$0xff] %v549
        %604 = vst [vmem:[#allocation2 + $0x20] sm:$0xff] %v554
        %605 = vst [vmem:[#allocation2 + $0x28] sm:$0xff] %v557
        %606 = vst [vmem:[#allocation2 + $0x30] sm:$0xff] %v562
        %607 = vst [vmem:[#allocation2 + $0x38] sm:$0xff] %v565
        %608 = vst [vmem:[#allocation2 + $0x40] sm:$0xff] %v570
        %609 = vst [vmem:[#allocation2 + $0x48] sm:$0xff] %v573
        %610 = vst [vmem:[#allocation2 + $0x50] sm:$0xff] %v578
        %611 = vst [vmem:[#allocation2 + $0x58] sm:$0xff] %v581
        %612 = vst [vmem:[#allocation2 + $0x60] sm:$0xff] %v586
        %613 = vst [vmem:[#allocation2 + $0x68] sm:$0xff] %v589
        %614 = vst [vmem:[#allocation2 + $0x70] sm:$0xff] %v594
        %615 = vst [vmem:[#allocation2 + $0x78] sm:$0xff] %v597
        %v616 = vld [vmem:[#allocation2] sm:$0xff]
        %v617 = vld [vmem:[#allocation2 + $0x8] sm:$0xff]
        %v618 = vld [vmem:[#allocation2 + $0x10] sm:$0xff]
        %v619 = vld [vmem:[#allocation2 + $0x18] sm:$0xff]
        %v620 = vld [vmem:[#allocation2 + $0x20] sm:$0xff]
        %v621 = vld [vmem:[#allocation2 + $0x28] sm:$0xff]
        %v622 = vld [vmem:[#allocation2 + $0x30] sm:$0xff]
        %v623 = vld [vmem:[#allocation2 + $0x38] sm:$0xff]
        %v624 = vld [vmem:[#allocation2 + $0x40] sm:$0xff]
        %v625 = vld [vmem:[#allocation2 + $0x48] sm:$0xff]
        %v626 = vld [vmem:[#allocation2 + $0x50] sm:$0xff]
        %v627 = vld [vmem:[#allocation2 + $0x58] sm:$0xff]
        %v628 = vld [vmem:[#allocation2 + $0x60] sm:$0xff]
        %v629 = vld [vmem:[#allocation2 + $0x68] sm:$0xff]
        %v630 = vld [vmem:[#allocation2 + $0x70] sm:$0xff]
        %v631 = vld [vmem:[#allocation2 + $0x78] sm:$0xff]
        %v632 = vpack.c.bf16 %v617, %v616
        %v633 = vpack.c.bf16 %v619, %v618
        %v634 = vpack.c.bf16 %v621, %v620
        %v635 = vpack.c.bf16 %v623, %v622
        %v636 = vpack.c.bf16 %v625, %v624
        %v637 = vpack.c.bf16 %v627, %v626
        %v638 = vpack.c.bf16 %v629, %v628
        %v639 = vpack.c.bf16 %v631, %v630
        %s640 = scalar_lea.vmem [#allocation3], 256
        %v641 = vld [vmem:[%s640] sm:$0xf]
        %v642 = vld [vmem:[%s640 + $0x4] sm:$0xf]
        %v643 = vld [vmem:[%s640 + $0x8] sm:$0xf]
        %v644 = vld [vmem:[%s640 + $0xc] sm:$0xf]
        %v645 = vld [vmem:[%s640 + $0x10] sm:$0xf]
        %v646 = vld [vmem:[%s640 + $0x14] sm:$0xf]
        %v647 = vld [vmem:[%s640 + $0x18] sm:$0xf]
        %v648 = vld [vmem:[%s640 + $0x1c] sm:$0xf]
        %v649 = vld [vmem:[%s640 + $0x20] sm:$0xf]
        %v650 = vld [vmem:[%s640 + $0x24] sm:$0xf]
        %v651 = vld [vmem:[%s640 + $0x28] sm:$0xf]
        %v652 = vld [vmem:[%s640 + $0x2c] sm:$0xf]
        %v653 = vld [vmem:[%s640 + $0x30] sm:$0xf]
        %v654 = vld [vmem:[%s640 + $0x34] sm:$0xf]
        %v655 = vld [vmem:[%s640 + $0x38] sm:$0xf]
        %v656 = vld [vmem:[%s640 + $0x3c] sm:$0xf]
        %v673 = vunpack.c.l.b16 %v641
        %v674 = vunpack.c.l.b16 %v642
        %v675 = vunpack.c.l.b16 %v643
        %v676 = vunpack.c.l.b16 %v644
        %v677 = vunpack.c.l.b16 %v645
        %v678 = vunpack.c.l.b16 %v646
        %v679 = vunpack.c.l.b16 %v647
        %v680 = vunpack.c.l.b16 %v648
        %v681 = vunpack.c.l.b16 %v649
        %v682 = vunpack.c.l.b16 %v650
        %v683 = vunpack.c.l.b16 %v651
        %v684 = vunpack.c.l.b16 %v652
        %v685 = vunpack.c.l.b16 %v653
        %v686 = vunpack.c.l.b16 %v654
        %v687 = vunpack.c.l.b16 %v655
        %v688 = vunpack.c.l.b16 %v656
        %v689 = vpack.c.b16 %v674, %v673
        %v690 = vpack.c.b16 %v676, %v675
        %v691 = vpack.c.b16 %v678, %v677
        %v692 = vpack.c.b16 %v680, %v679
        %v693 = vpack.c.b16 %v682, %v681
        %v694 = vpack.c.b16 %v684, %v683
        %v695 = vpack.c.b16 %v686, %v685
        %v696 = vpack.c.b16 %v688, %v687
        %705 = vmatprep.subr.bf16.mxu0 0
        %706 = vmatpush1.bf16.msra.mxu0 %v689
        %707 = vmatprep.subr.bf16.mxu0 0
        %708 = vmatpush1.bf16.msra.mxu0 %v690
        %709 = vmatprep.subr.bf16.mxu0 0
        %710 = vmatpush1.bf16.msra.mxu0 %v691
        %711 = vmatprep.subr.bf16.mxu0 0
        %712 = vmatpush1.bf16.msra.mxu0 %v692
        %713 = vmatprep.subr.bf16.mxu0 0
        %714 = vmatpush1.bf16.msra.mxu0 %v693
        %715 = vmatprep.subr.bf16.mxu0 0
        %716 = vmatpush1.bf16.msra.mxu0 %v694
        %717 = vmatprep.subr.bf16.mxu0 0
        %718 = vmatpush1.bf16.msra.mxu0 %v695
        %719 = vmatprep.subr.bf16.mxu0 0
        %720 = vmatpush1.bf16.msra.mxu0 %v696
        %721 = vmatprep.subr.bf16.mxu0 0
        %722 = vmatpush1.bf16.msra.mxu0 0
        %723 = vmatprep.subr.bf16.mxu0 0
        %724 = vmatpush1.bf16.msra.mxu0 0
        %725 = vmatprep.subr.bf16.mxu0 0
        %726 = vmatpush1.bf16.msra.mxu0 0
        %727 = vmatprep.subr.bf16.mxu0 0
        %728 = vmatpush1.bf16.msra.mxu0 0
        %729 = vmatprep.subr.bf16.mxu0 0
        %730 = vmatpush1.bf16.msra.mxu0 0
        %731 = vmatprep.subr.bf16.mxu0 0
        %732 = vmatpush1.bf16.msra.mxu0 0
        %733 = vmatprep.subr.bf16.mxu0 0
        %734 = vmatpush1.bf16.msra.mxu0 0
        %735 = vmatprep.subr.bf16.mxu0 0
        %736 = vmatpush1.bf16.msra.mxu0 0
        %737 = vmatprep.mubr.bf16.mxu0 0
        %738 = vmatmul.mubr.bf16.gmra.mrb[0].mxu0 %v632
        %v739 = vpop.f32.mrb[0].mxu0
        %v740 = vadd.f32 0.0, %v739
        %v741 = vpop.f32.mrb[0].mxu0
        %v742 = vpop.f32.mrb[0].mxu0
        %v743 = vadd.f32 0.0, %v742
        %v744 = vpop.f32.mrb[0].mxu0
        %745 = vmatprep.mubr.bf16.mxu0 0
        %746 = vmatmul.mubr.bf16.gmra.mrb[0].mxu0 %v633
        %v747 = vpop.f32.mrb[0].mxu0
        %v748 = vadd.f32 0.0, %v747
        %v749 = vpop.f32.mrb[0].mxu0
        %v750 = vpop.f32.mrb[0].mxu0
        %v751 = vadd.f32 0.0, %v750
        %v752 = vpop.f32.mrb[0].mxu0
        %753 = vmatprep.mubr.bf16.mxu0 0
        %754 = vmatmul.mubr.bf16.gmra.mrb[0].mxu0 %v634
        %v755 = vpop.f32.mrb[0].mxu0
        %v756 = vadd.f32 0.0, %v755
        %v757 = vpop.f32.mrb[0].mxu0
        %v758 = vpop.f32.mrb[0].mxu0
        %v759 = vadd.f32 0.0, %v758
        %v760 = vpop.f32.mrb[0].mxu0
        %761 = vmatprep.mubr.bf16.mxu0 0
        %762 = vmatmul.mubr.bf16.gmra.mrb[0].mxu0 %v635
        %v763 = vpop.f32.mrb[0].mxu0
        %v764 = vadd.f32 0.0, %v763
        %v765 = vpop.f32.mrb[0].mxu0
        %v766 = vpop.f32.mrb[0].mxu0
        %v767 = vadd.f32 0.0, %v766
        %v768 = vpop.f32.mrb[0].mxu0
        %769 = vmatprep.mubr.bf16.mxu0 0
        %770 = vmatmul.mubr.bf16.gmra.mrb[0].mxu0 %v636
        %v771 = vpop.f32.mrb[0].mxu0
        %v772 = vadd.f32 0.0, %v771
        %v773 = vpop.f32.mrb[0].mxu0
        %v774 = vpop.f32.mrb[0].mxu0
        %v775 = vadd.f32 0.0, %v774
        %v776 = vpop.f32.mrb[0].mxu0
        %777 = vmatprep.mubr.bf16.mxu0 0
        %778 = vmatmul.mubr.bf16.gmra.mrb[0].mxu0 %v637
        %v779 = vpop.f32.mrb[0].mxu0
        %v780 = vadd.f32 0.0, %v779
        %v781 = vpop.f32.mrb[0].mxu0
        %v782 = vpop.f32.mrb[0].mxu0
        %v783 = vadd.f32 0.0, %v782
        %v784 = vpop.f32.mrb[0].mxu0
        %785 = vmatprep.mubr.bf16.mxu0 0
        %786 = vmatmul.mubr.bf16.gmra.mrb[0].mxu0 %v638
        %v787 = vpop.f32.mrb[0].mxu0
        %v788 = vadd.f32 0.0, %v787
        %v789 = vpop.f32.mrb[0].mxu0
        %v790 = vpop.f32.mrb[0].mxu0
        %v791 = vadd.f32 0.0, %v790
        %v792 = vpop.f32.mrb[0].mxu0
        %793 = vmatprep.mubr.bf16.mxu0 0
        %794 = vmatmul.mubr.bf16.gmra.mrb[0].mxu0 %v639
        %v795 = vpop.f32.mrb[0].mxu0
        %v796 = vadd.f32 0.0, %v795
        %v797 = vpop.f32.mrb[0].mxu0
        %v798 = vpop.f32.mrb[0].mxu0
        %v799 = vadd.f32 0.0, %v798
        %v800 = vpop.f32.mrb[0].mxu0
        %801 = vdwg.mxu0
        %802 = vst [vmem:[#allocation2] sm:$0xff] %v740
        %803 = vst [vmem:[#allocation2 + $0x8] sm:$0xff] %v743
        %804 = vst [vmem:[#allocation2 + $0x10] sm:$0xff] %v748
        %805 = vst [vmem:[#allocation2 + $0x18] sm:$0xff] %v751
        %806 = vst [vmem:[#allocation2 + $0x20] sm:$0xff] %v756
        %807 = vst [vmem:[#allocation2 + $0x28] sm:$0xff] %v759
        %808 = vst [vmem:[#allocation2 + $0x30] sm:$0xff] %v764
        %809 = vst [vmem:[#allocation2 + $0x38] sm:$0xff] %v767
        %810 = vst [vmem:[#allocation2 + $0x40] sm:$0xff] %v772
        %811 = vst [vmem:[#allocation2 + $0x48] sm:$0xff] %v775
        %812 = vst [vmem:[#allocation2 + $0x50] sm:$0xff] %v780
        %813 = vst [vmem:[#allocation2 + $0x58] sm:$0xff] %v783
        %814 = vst [vmem:[#allocation2 + $0x60] sm:$0xff] %v788
        %815 = vst [vmem:[#allocation2 + $0x68] sm:$0xff] %v791
        %816 = vst [vmem:[#allocation2 + $0x70] sm:$0xff] %v796
        %817 = vst [vmem:[#allocation2 + $0x78] sm:$0xff] %v799
        %v818 = vld [vmem:[#allocation2] sm:$0xff]
        %v819 = vld [vmem:[#allocation2 + $0x8] sm:$0xff]
        %v820 = vld [vmem:[#allocation2 + $0x10] sm:$0xff]
        %v821 = vld [vmem:[#allocation2 + $0x18] sm:$0xff]
        %v822 = vld [vmem:[#allocation2 + $0x20] sm:$0xff]
        %v823 = vld [vmem:[#allocation2 + $0x28] sm:$0xff]
        %v824 = vld [vmem:[#allocation2 + $0x30] sm:$0xff]
        %v825 = vld [vmem:[#allocation2 + $0x38] sm:$0xff]
        %v826 = vld [vmem:[#allocation2 + $0x40] sm:$0xff]
        %v827 = vld [vmem:[#allocation2 + $0x48] sm:$0xff]
        %v828 = vld [vmem:[#allocation2 + $0x50] sm:$0xff]
        %v829 = vld [vmem:[#allocation2 + $0x58] sm:$0xff]
        %v830 = vld [vmem:[#allocation2 + $0x60] sm:$0xff]
        %v831 = vld [vmem:[#allocation2 + $0x68] sm:$0xff]
        %v832 = vld [vmem:[#allocation2 + $0x70] sm:$0xff]
        %v833 = vld [vmem:[#allocation2 + $0x78] sm:$0xff]
        %v834 = vpack.c.bf16 %v819, %v818
        %v835 = vpack.c.bf16 %v821, %v820
        %v836 = vpack.c.bf16 %v823, %v822
        %v837 = vpack.c.bf16 %v825, %v824
        %v838 = vpack.c.bf16 %v827, %v826
        %v839 = vpack.c.bf16 %v829, %v828
        %v840 = vpack.c.bf16 %v831, %v830
        %v841 = vpack.c.bf16 %v833, %v832
        %s842 = scalar_lea.vmem [#allocation3], 192
        %v843 = vld [vmem:[%s842] sm:$0xf]
        %v844 = vld [vmem:[%s842 + $0x4] sm:$0xf]
        %v845 = vld [vmem:[%s842 + $0x8] sm:$0xf]
        %v846 = vld [vmem:[%s842 + $0xc] sm:$0xf]
        %v847 = vld [vmem:[%s842 + $0x10] sm:$0xf]
        %v848 = vld [vmem:[%s842 + $0x14] sm:$0xf]
        %v849 = vld [vmem:[%s842 + $0x18] sm:$0xf]
        %v850 = vld [vmem:[%s842 + $0x1c] sm:$0xf]
        %v851 = vld [vmem:[%s842 + $0x20] sm:$0xf]
        %v852 = vld [vmem:[%s842 + $0x24] sm:$0xf]
        %v853 = vld [vmem:[%s842 + $0x28] sm:$0xf]
        %v854 = vld [vmem:[%s842 + $0x2c] sm:$0xf]
        %v855 = vld [vmem:[%s842 + $0x30] sm:$0xf]
        %v856 = vld [vmem:[%s842 + $0x34] sm:$0xf]
        %v857 = vld [vmem:[%s842 + $0x38] sm:$0xf]
        %v858 = vld [vmem:[%s842 + $0x3c] sm:$0xf]
        %v875 = vunpack.c.l.b16 %v843
        %v876 = vunpack.c.l.b16 %v844
        %v877 = vunpack.c.l.b16 %v845
        %v878 = vunpack.c.l.b16 %v846
        %v879 = vunpack.c.l.b16 %v847
        %v880 = vunpack.c.l.b16 %v848
        %v881 = vunpack.c.l.b16 %v849
        %v882 = vunpack.c.l.b16 %v850
        %v883 = vunpack.c.l.b16 %v851
        %v884 = vunpack.c.l.b16 %v852
        %v885 = vunpack.c.l.b16 %v853
        %v886 = vunpack.c.l.b16 %v854
        %v887 = vunpack.c.l.b16 %v855
        %v888 = vunpack.c.l.b16 %v856
        %v889 = vunpack.c.l.b16 %v857
        %v890 = vunpack.c.l.b16 %v858
        %v891 = vpack.c.b16 %v876, %v875
        %v892 = vpack.c.b16 %v878, %v877
        %v893 = vpack.c.b16 %v880, %v879
        %v894 = vpack.c.b16 %v882, %v881
        %v895 = vpack.c.b16 %v884, %v883
        %v896 = vpack.c.b16 %v886, %v885
        %v897 = vpack.c.b16 %v888, %v887
        %v898 = vpack.c.b16 %v890, %v889
        %907 = vmatprep.subr.bf16.mxu0 0
        %908 = vmatpush1.bf16.msra.mxu0 %v891
        %909 = vmatprep.subr.bf16.mxu0 0
        %910 = vmatpush1.bf16.msra.mxu0 %v892
        %911 = vmatprep.subr.bf16.mxu0 0
        %912 = vmatpush1.bf16.msra.mxu0 %v893
        %913 = vmatprep.subr.bf16.mxu0 0
        %914 = vmatpush1.bf16.msra.mxu0 %v894
        %915 = vmatprep.subr.bf16.mxu0 0
        %916 = vmatpush1.bf16.msra.mxu0 %v895
        %917 = vmatprep.subr.bf16.mxu0 0
        %918 = vmatpush1.bf16.msra.mxu0 %v896
        %919 = vmatprep.subr.bf16.mxu0 0
        %920 = vmatpush1.bf16.msra.mxu0 %v897
        %921 = vmatprep.subr.bf16.mxu0 0
        %922 = vmatpush1.bf16.msra.mxu0 %v898
        %923 = vmatprep.subr.bf16.mxu0 0
        %924 = vmatpush1.bf16.msra.mxu0 0
        %925 = vmatprep.subr.bf16.mxu0 0
        %926 = vmatpush1.bf16.msra.mxu0 0
        %927 = vmatprep.subr.bf16.mxu0 0
        %928 = vmatpush1.bf16.msra.mxu0 0
        %929 = vmatprep.subr.bf16.mxu0 0
        %930 = vmatpush1.bf16.msra.mxu0 0
        %931 = vmatprep.subr.bf16.mxu0 0
        %932 = vmatpush1.bf16.msra.mxu0 0
        %933 = vmatprep.subr.bf16.mxu0 0
        %934 = vmatpush1.bf16.msra.mxu0 0
        %935 = vmatprep.subr.bf16.mxu0 0
        %936 = vmatpush1.bf16.msra.mxu0 0
        %937 = vmatprep.subr.bf16.mxu0 0
        %938 = vmatpush1.bf16.msra.mxu0 0
        %939 = vmatprep.mubr.bf16.mxu0 0
        %940 = vmatmul.mubr.bf16.gmra.mrb[0].mxu0 %v834
        %v941 = vpop.f32.mrb[0].mxu0
        %v942 = vadd.f32 0.0, %v941
        %v943 = vpop.f32.mrb[0].mxu0
        %v944 = vpop.f32.mrb[0].mxu0
        %v945 = vadd.f32 0.0, %v944
        %v946 = vpop.f32.mrb[0].mxu0
        %947 = vmatprep.mubr.bf16.mxu0 0
        %948 = vmatmul.mubr.bf16.gmra.mrb[0].mxu0 %v835
        %v949 = vpop.f32.mrb[0].mxu0
        %v950 = vadd.f32 0.0, %v949
        %v951 = vpop.f32.mrb[0].mxu0
        %v952 = vpop.f32.mrb[0].mxu0
        %v953 = vadd.f32 0.0, %v952
        %v954 = vpop.f32.mrb[0].mxu0
        %955 = vmatprep.mubr.bf16.mxu0 0
        %956 = vmatmul.mubr.bf16.gmra.mrb[0].mxu0 %v836
        %v957 = vpop.f32.mrb[0].mxu0
        %v958 = vadd.f32 0.0, %v957
        %v959 = vpop.f32.mrb[0].mxu0
        %v960 = vpop.f32.mrb[0].mxu0
        %v961 = vadd.f32 0.0, %v960
        %v962 = vpop.f32.mrb[0].mxu0
        %963 = vmatprep.mubr.bf16.mxu0 0
        %964 = vmatmul.mubr.bf16.gmra.mrb[0].mxu0 %v837
        %v965 = vpop.f32.mrb[0].mxu0
        %v966 = vadd.f32 0.0, %v965
        %v967 = vpop.f32.mrb[0].mxu0
        %v968 = vpop.f32.mrb[0].mxu0
        %v969 = vadd.f32 0.0, %v968
        %v970 = vpop.f32.mrb[0].mxu0
        %971 = vmatprep.mubr.bf16.mxu0 0
        %972 = vmatmul.mubr.bf16.gmra.mrb[0].mxu0 %v838
        %v973 = vpop.f32.mrb[0].mxu0
        %v974 = vadd.f32 0.0, %v973
        %v975 = vpop.f32.mrb[0].mxu0
        %v976 = vpop.f32.mrb[0].mxu0
        %v977 = vadd.f32 0.0, %v976
        %v978 = vpop.f32.mrb[0].mxu0
        %979 = vmatprep.mubr.bf16.mxu0 0
        %980 = vmatmul.mubr.bf16.gmra.mrb[0].mxu0 %v839
        %v981 = vpop.f32.mrb[0].mxu0
        %v982 = vadd.f32 0.0, %v981
        %v983 = vpop.f32.mrb[0].mxu0
        %v984 = vpop.f32.mrb[0].mxu0
        %v985 = vadd.f32 0.0, %v984
        %v986 = vpop.f32.mrb[0].mxu0
        %987 = vmatprep.mubr.bf16.mxu0 0
        %988 = vmatmul.mubr.bf16.gmra.mrb[0].mxu0 %v840
        %v989 = vpop.f32.mrb[0].mxu0
        %v990 = vadd.f32 0.0, %v989
        %v991 = vpop.f32.mrb[0].mxu0
        %v992 = vpop.f32.mrb[0].mxu0
        %v993 = vadd.f32 0.0, %v992
        %v994 = vpop.f32.mrb[0].mxu0
        %995 = vmatprep.mubr.bf16.mxu0 0
        %996 = vmatmul.mubr.bf16.gmra.mrb[0].mxu0 %v841
        %v997 = vpop.f32.mrb[0].mxu0
        %v998 = vadd.f32 0.0, %v997
        %v999 = vpop.f32.mrb[0].mxu0
        %v1000 = vpop.f32.mrb[0].mxu0
        %v1001 = vadd.f32 0.0, %v1000
        %v1002 = vpop.f32.mrb[0].mxu0
        %1003 = vdwg.mxu0
        %1004 = vst [vmem:[#allocation2] sm:$0xff] %v942
        %1005 = vst [vmem:[#allocation2 + $0x8] sm:$0xff] %v945
        %1006 = vst [vmem:[#allocation2 + $0x10] sm:$0xff] %v950
        %1007 = vst [vmem:[#allocation2 + $0x18] sm:$0xff] %v953
        %1008 = vst [vmem:[#allocation2 + $0x20] sm:$0xff] %v958
        %1009 = vst [vmem:[#allocation2 + $0x28] sm:$0xff] %v961
        %1010 = vst [vmem:[#allocation2 + $0x30] sm:$0xff] %v966
        %1011 = vst [vmem:[#allocation2 + $0x38] sm:$0xff] %v969
        %1012 = vst [vmem:[#allocation2 + $0x40] sm:$0xff] %v974
        %1013 = vst [vmem:[#allocation2 + $0x48] sm:$0xff] %v977
        %1014 = vst [vmem:[#allocation2 + $0x50] sm:$0xff] %v982
        %1015 = vst [vmem:[#allocation2 + $0x58] sm:$0xff] %v985
        %1016 = vst [vmem:[#allocation2 + $0x60] sm:$0xff] %v990
        %1017 = vst [vmem:[#allocation2 + $0x68] sm:$0xff] %v993
        %1018 = vst [vmem:[#allocation2 + $0x70] sm:$0xff] %v998
        %1019 = vst [vmem:[#allocation2 + $0x78] sm:$0xff] %v1001
        %v1020 = vld [vmem:[#allocation2] sm:$0xff]
        %v1021 = vld [vmem:[#allocation2 + $0x8] sm:$0xff]
        %v1022 = vld [vmem:[#allocation2 + $0x10] sm:$0xff]
        %v1023 = vld [vmem:[#allocation2 + $0x18] sm:$0xff]
        %v1024 = vld [vmem:[#allocation2 + $0x20] sm:$0xff]
        %v1025 = vld [vmem:[#allocation2 + $0x28] sm:$0xff]
        %v1026 = vld [vmem:[#allocation2 + $0x30] sm:$0xff]
        %v1027 = vld [vmem:[#allocation2 + $0x38] sm:$0xff]
        %v1028 = vld [vmem:[#allocation2 + $0x40] sm:$0xff]
        %v1029 = vld [vmem:[#allocation2 + $0x48] sm:$0xff]
        %v1030 = vld [vmem:[#allocation2 + $0x50] sm:$0xff]
        %v1031 = vld [vmem:[#allocation2 + $0x58] sm:$0xff]
        %v1032 = vld [vmem:[#allocation2 + $0x60] sm:$0xff]
        %v1033 = vld [vmem:[#allocation2 + $0x68] sm:$0xff]
        %v1034 = vld [vmem:[#allocation2 + $0x70] sm:$0xff]
        %v1035 = vld [vmem:[#allocation2 + $0x78] sm:$0xff]
        %v1036 = vpack.c.bf16 %v1021, %v1020
        %v1037 = vpack.c.bf16 %v1023, %v1022
        %v1038 = vpack.c.bf16 %v1025, %v1024
        %v1039 = vpack.c.bf16 %v1027, %v1026
        %v1040 = vpack.c.bf16 %v1029, %v1028
        %v1041 = vpack.c.bf16 %v1031, %v1030
        %v1042 = vpack.c.bf16 %v1033, %v1032
        %v1043 = vpack.c.bf16 %v1035, %v1034
        %s1044 = scalar_lea.vmem [#allocation3], 128
        %v1045 = vld [vmem:[%s1044] sm:$0xf]
        %v1046 = vld [vmem:[%s1044 + $0x4] sm:$0xf]
        %v1047 = vld [vmem:[%s1044 + $0x8] sm:$0xf]
        %v1048 = vld [vmem:[%s1044 + $0xc] sm:$0xf]
        %v1049 = vld [vmem:[%s1044 + $0x10] sm:$0xf]
        %v1050 = vld [vmem:[%s1044 + $0x14] sm:$0xf]
        %v1051 = vld [vmem:[%s1044 + $0x18] sm:$0xf]
        %v1052 = vld [vmem:[%s1044 + $0x1c] sm:$0xf]
        %v1053 = vld [vmem:[%s1044 + $0x20] sm:$0xf]
        %v1054 = vld [vmem:[%s1044 + $0x24] sm:$0xf]
        %v1055 = vld [vmem:[%s1044 + $0x28] sm:$0xf]
        %v1056 = vld [vmem:[%s1044 + $0x2c] sm:$0xf]
        %v1057 = vld [vmem:[%s1044 + $0x30] sm:$0xf]
        %v1058 = vld [vmem:[%s1044 + $0x34] sm:$0xf]
        %v1059 = vld [vmem:[%s1044 + $0x38] sm:$0xf]
        %v1060 = vld [vmem:[%s1044 + $0x3c] sm:$0xf]
        %v1077 = vunpack.c.l.b16 %v1045
        %v1078 = vunpack.c.l.b16 %v1046
        %v1079 = vunpack.c.l.b16 %v1047
        %v1080 = vunpack.c.l.b16 %v1048
        %v1081 = vunpack.c.l.b16 %v1049
        %v1082 = vunpack.c.l.b16 %v1050
        %v1083 = vunpack.c.l.b16 %v1051
        %v1084 = vunpack.c.l.b16 %v1052
        %v1085 = vunpack.c.l.b16 %v1053
        %v1086 = vunpack.c.l.b16 %v1054
        %v1087 = vunpack.c.l.b16 %v1055
        %v1088 = vunpack.c.l.b16 %v1056
        %v1089 = vunpack.c.l.b16 %v1057
        %v1090 = vunpack.c.l.b16 %v1058
        %v1091 = vunpack.c.l.b16 %v1059
        %v1092 = vunpack.c.l.b16 %v1060
        %v1093 = vpack.c.b16 %v1078, %v1077
        %v1094 = vpack.c.b16 %v1080, %v1079
        %v1095 = vpack.c.b16 %v1082, %v1081
        %v1096 = vpack.c.b16 %v1084, %v1083
        %v1097 = vpack.c.b16 %v1086, %v1085
        %v1098 = vpack.c.b16 %v1088, %v1087
        %v1099 = vpack.c.b16 %v1090, %v1089
        %v1100 = vpack.c.b16 %v1092, %v1091
        %1109 = vmatprep.subr.bf16.mxu0 0
        %1110 = vmatpush1.bf16.msra.mxu0 %v1093
        %1111 = vmatprep.subr.bf16.mxu0 0
        %1112 = vmatpush1.bf16.msra.mxu0 %v1094
        %1113 = vmatprep.subr.bf16.mxu0 0
        %1114 = vmatpush1.bf16.msra.mxu0 %v1095
        %1115 = vmatprep.subr.bf16.mxu0 0
        %1116 = vmatpush1.bf16.msra.mxu0 %v1096
        %1117 = vmatprep.subr.bf16.mxu0 0
        %1118 = vmatpush1.bf16.msra.mxu0 %v1097
        %1119 = vmatprep.subr.bf16.mxu0 0
        %1120 = vmatpush1.bf16.msra.mxu0 %v1098
        %1121 = vmatprep.subr.bf16.mxu0 0
        %1122 = vmatpush1.bf16.msra.mxu0 %v1099
        %1123 = vmatprep.subr.bf16.mxu0 0
        %1124 = vmatpush1.bf16.msra.mxu0 %v1100
        %1125 = vmatprep.subr.bf16.mxu0 0
        %1126 = vmatpush1.bf16.msra.mxu0 0
        %1127 = vmatprep.subr.bf16.mxu0 0
        %1128 = vmatpush1.bf16.msra.mxu0 0
        %1129 = vmatprep.subr.bf16.mxu0 0
        %1130 = vmatpush1.bf16.msra.mxu0 0
        %1131 = vmatprep.subr.bf16.mxu0 0
        %1132 = vmatpush1.bf16.msra.mxu0 0
        %1133 = vmatprep.subr.bf16.mxu0 0
        %1134 = vmatpush1.bf16.msra.mxu0 0
        %1135 = vmatprep.subr.bf16.mxu0 0
        %1136 = vmatpush1.bf16.msra.mxu0 0
        %1137 = vmatprep.subr.bf16.mxu0 0
        %1138 = vmatpush1.bf16.msra.mxu0 0
        %1139 = vmatprep.subr.bf16.mxu0 0
        %1140 = vmatpush1.bf16.msra.mxu0 0
        %1141 = vmatprep.mubr.bf16.mxu0 0
        %1142 = vmatmul.mubr.bf16.gmra.mrb[0].mxu0 %v1036
        %v1143 = vpop.f32.mrb[0].mxu0
        %v1144 = vadd.f32 0.0, %v1143
        %v1145 = vpop.f32.mrb[0].mxu0
        %v1146 = vpop.f32.mrb[0].mxu0
        %v1147 = vadd.f32 0.0, %v1146
        %v1148 = vpop.f32.mrb[0].mxu0
        %1149 = vmatprep.mubr.bf16.mxu0 0
        %1150 = vmatmul.mubr.bf16.gmra.mrb[0].mxu0 %v1037
        %v1151 = vpop.f32.mrb[0].mxu0
        %v1152 = vadd.f32 0.0, %v1151
        %v1153 = vpop.f32.mrb[0].mxu0
        %v1154 = vpop.f32.mrb[0].mxu0
        %v1155 = vadd.f32 0.0, %v1154
        %v1156 = vpop.f32.mrb[0].mxu0
        %1157 = vmatprep.mubr.bf16.mxu0 0
        %1158 = vmatmul.mubr.bf16.gmra.mrb[0].mxu0 %v1038
        %v1159 = vpop.f32.mrb[0].mxu0
        %v1160 = vadd.f32 0.0, %v1159
        %v1161 = vpop.f32.mrb[0].mxu0
        %v1162 = vpop.f32.mrb[0].mxu0
        %v1163 = vadd.f32 0.0, %v1162
        %v1164 = vpop.f32.mrb[0].mxu0
        %1165 = vmatprep.mubr.bf16.mxu0 0
        %1166 = vmatmul.mubr.bf16.gmra.mrb[0].mxu0 %v1039
        %v1167 = vpop.f32.mrb[0].mxu0
        %v1168 = vadd.f32 0.0, %v1167
        %v1169 = vpop.f32.mrb[0].mxu0
        %v1170 = vpop.f32.mrb[0].mxu0
        %v1171 = vadd.f32 0.0, %v1170
        %v1172 = vpop.f32.mrb[0].mxu0
        %1173 = vmatprep.mubr.bf16.mxu0 0
        %1174 = vmatmul.mubr.bf16.gmra.mrb[0].mxu0 %v1040
        %v1175 = vpop.f32.mrb[0].mxu0
        %v1176 = vadd.f32 0.0, %v1175
        %v1177 = vpop.f32.mrb[0].mxu0
        %v1178 = vpop.f32.mrb[0].mxu0
        %v1179 = vadd.f32 0.0, %v1178
        %v1180 = vpop.f32.mrb[0].mxu0
        %1181 = vmatprep.mubr.bf16.mxu0 0
        %1182 = vmatmul.mubr.bf16.gmra.mrb[0].mxu0 %v1041
        %v1183 = vpop.f32.mrb[0].mxu0
        %v1184 = vadd.f32 0.0, %v1183
        %v1185 = vpop.f32.mrb[0].mxu0
        %v1186 = vpop.f32.mrb[0].mxu0
        %v1187 = vadd.f32 0.0, %v1186
        %v1188 = vpop.f32.mrb[0].mxu0
        %1189 = vmatprep.mubr.bf16.mxu0 0
        %1190 = vmatmul.mubr.bf16.gmra.mrb[0].mxu0 %v1042
        %v1191 = vpop.f32.mrb[0].mxu0
        %v1192 = vadd.f32 0.0, %v1191
        %v1193 = vpop.f32.mrb[0].mxu0
        %v1194 = vpop.f32.mrb[0].mxu0
        %v1195 = vadd.f32 0.0, %v1194
        %v1196 = vpop.f32.mrb[0].mxu0
        %1197 = vmatprep.mubr.bf16.mxu0 0
        %1198 = vmatmul.mubr.bf16.gmra.mrb[0].mxu0 %v1043
        %v1199 = vpop.f32.mrb[0].mxu0
        %v1200 = vadd.f32 0.0, %v1199
        %v1201 = vpop.f32.mrb[0].mxu0
        %v1202 = vpop.f32.mrb[0].mxu0
        %v1203 = vadd.f32 0.0, %v1202
        %v1204 = vpop.f32.mrb[0].mxu0
        %1205 = vdwg.mxu0
        %1206 = vst [vmem:[#allocation2] sm:$0xff] %v1144
        %1207 = vst [vmem:[#allocation2 + $0x8] sm:$0xff] %v1147
        %1208 = vst [vmem:[#allocation2 + $0x10] sm:$0xff] %v1152
        %1209 = vst [vmem:[#allocation2 + $0x18] sm:$0xff] %v1155
        %1210 = vst [vmem:[#allocation2 + $0x20] sm:$0xff] %v1160
        %1211 = vst [vmem:[#allocation2 + $0x28] sm:$0xff] %v1163
        %1212 = vst [vmem:[#allocation2 + $0x30] sm:$0xff] %v1168
        %1213 = vst [vmem:[#allocation2 + $0x38] sm:$0xff] %v1171
        %1214 = vst [vmem:[#allocation2 + $0x40] sm:$0xff] %v1176
        %1215 = vst [vmem:[#allocation2 + $0x48] sm:$0xff] %v1179
        %1216 = vst [vmem:[#allocation2 + $0x50] sm:$0xff] %v1184
        %1217 = vst [vmem:[#allocation2 + $0x58] sm:$0xff] %v1187
        %1218 = vst [vmem:[#allocation2 + $0x60] sm:$0xff] %v1192
        %1219 = vst [vmem:[#allocation2 + $0x68] sm:$0xff] %v1195
        %1220 = vst [vmem:[#allocation2 + $0x70] sm:$0xff] %v1200
        %1221 = vst [vmem:[#allocation2 + $0x78] sm:$0xff] %v1203
        %v1222 = vld [vmem:[#allocation2] sm:$0xff]
        %v1223 = vld [vmem:[#allocation2 + $0x8] sm:$0xff]
        %v1224 = vld [vmem:[#allocation2 + $0x10] sm:$0xff]
        %v1225 = vld [vmem:[#allocation2 + $0x18] sm:$0xff]
        %v1226 = vld [vmem:[#allocation2 + $0x20] sm:$0xff]
        %v1227 = vld [vmem:[#allocation2 + $0x28] sm:$0xff]
        %v1228 = vld [vmem:[#allocation2 + $0x30] sm:$0xff]
        %v1229 = vld [vmem:[#allocation2 + $0x38] sm:$0xff]
        %v1230 = vld [vmem:[#allocation2 + $0x40] sm:$0xff]
        %v1231 = vld [vmem:[#allocation2 + $0x48] sm:$0xff]
        %v1232 = vld [vmem:[#allocation2 + $0x50] sm:$0xff]
        %v1233 = vld [vmem:[#allocation2 + $0x58] sm:$0xff]
        %v1234 = vld [vmem:[#allocation2 + $0x60] sm:$0xff]
        %v1235 = vld [vmem:[#allocation2 + $0x68] sm:$0xff]
        %v1236 = vld [vmem:[#allocation2 + $0x70] sm:$0xff]
        %v1237 = vld [vmem:[#allocation2 + $0x78] sm:$0xff]
        %v1238 = vpack.c.bf16 %v1223, %v1222
        %v1239 = vpack.c.bf16 %v1225, %v1224
        %v1240 = vpack.c.bf16 %v1227, %v1226
        %v1241 = vpack.c.bf16 %v1229, %v1228
        %v1242 = vpack.c.bf16 %v1231, %v1230
        %v1243 = vpack.c.bf16 %v1233, %v1232
        %v1244 = vpack.c.bf16 %v1235, %v1234
        %v1245 = vpack.c.bf16 %v1237, %v1236
        %s1246 = scalar_lea.vmem [#allocation3], 64
        %v1247 = vld [vmem:[%s1246] sm:$0xf]
        %v1248 = vld [vmem:[%s1246 + $0x4] sm:$0xf]
        %v1249 = vld [vmem:[%s1246 + $0x8] sm:$0xf]
        %v1250 = vld [vmem:[%s1246 + $0xc] sm:$0xf]
        %v1251 = vld [vmem:[%s1246 + $0x10] sm:$0xf]
        %v1252 = vld [vmem:[%s1246 + $0x14] sm:$0xf]
        %v1253 = vld [vmem:[%s1246 + $0x18] sm:$0xf]
        %v1254 = vld [vmem:[%s1246 + $0x1c] sm:$0xf]
        %v1255 = vld [vmem:[%s1246 + $0x20] sm:$0xf]
        %v1256 = vld [vmem:[%s1246 + $0x24] sm:$0xf]
        %v1257 = vld [vmem:[%s1246 + $0x28] sm:$0xf]
        %v1258 = vld [vmem:[%s1246 + $0x2c] sm:$0xf]
        %v1259 = vld [vmem:[%s1246 + $0x30] sm:$0xf]
        %v1260 = vld [vmem:[%s1246 + $0x34] sm:$0xf]
        %v1261 = vld [vmem:[%s1246 + $0x38] sm:$0xf]
        %v1262 = vld [vmem:[%s1246 + $0x3c] sm:$0xf]
        %v1279 = vunpack.c.l.b16 %v1247
        %v1280 = vunpack.c.l.b16 %v1248
        %v1281 = vunpack.c.l.b16 %v1249
        %v1282 = vunpack.c.l.b16 %v1250
        %v1283 = vunpack.c.l.b16 %v1251
        %v1284 = vunpack.c.l.b16 %v1252
        %v1285 = vunpack.c.l.b16 %v1253
        %v1286 = vunpack.c.l.b16 %v1254
        %v1287 = vunpack.c.l.b16 %v1255
        %v1288 = vunpack.c.l.b16 %v1256
        %v1289 = vunpack.c.l.b16 %v1257
        %v1290 = vunpack.c.l.b16 %v1258
        %v1291 = vunpack.c.l.b16 %v1259
        %v1292 = vunpack.c.l.b16 %v1260
        %v1293 = vunpack.c.l.b16 %v1261
        %v1294 = vunpack.c.l.b16 %v1262
        %v1295 = vpack.c.b16 %v1280, %v1279
        %v1296 = vpack.c.b16 %v1282, %v1281
        %v1297 = vpack.c.b16 %v1284, %v1283
        %v1298 = vpack.c.b16 %v1286, %v1285
        %v1299 = vpack.c.b16 %v1288, %v1287
        %v1300 = vpack.c.b16 %v1290, %v1289
        %v1301 = vpack.c.b16 %v1292, %v1291
        %v1302 = vpack.c.b16 %v1294, %v1293
        %1311 = vmatprep.subr.bf16.mxu0 0
        %1312 = vmatpush1.bf16.msra.mxu0 %v1295
        %1313 = vmatprep.subr.bf16.mxu0 0
        %1314 = vmatpush1.bf16.msra.mxu0 %v1296
        %1315 = vmatprep.subr.bf16.mxu0 0
        %1316 = vmatpush1.bf16.msra.mxu0 %v1297
        %1317 = vmatprep.subr.bf16.mxu0 0
        %1318 = vmatpush1.bf16.msra.mxu0 %v1298
        %1319 = vmatprep.subr.bf16.mxu0 0
        %1320 = vmatpush1.bf16.msra.mxu0 %v1299
        %1321 = vmatprep.subr.bf16.mxu0 0
        %1322 = vmatpush1.bf16.msra.mxu0 %v1300
        %1323 = vmatprep.subr.bf16.mxu0 0
        %1324 = vmatpush1.bf16.msra.mxu0 %v1301
        %1325 = vmatprep.subr.bf16.mxu0 0
        %1326 = vmatpush1.bf16.msra.mxu0 %v1302
        %1327 = vmatprep.subr.bf16.mxu0 0
        %1328 = vmatpush1.bf16.msra.mxu0 0
        %1329 = vmatprep.subr.bf16.mxu0 0
        %1330 = vmatpush1.bf16.msra.mxu0 0
        %1331 = vmatprep.subr.bf16.mxu0 0
        %1332 = vmatpush1.bf16.msra.mxu0 0
        %1333 = vmatprep.subr.bf16.mxu0 0
        %1334 = vmatpush1.bf16.msra.mxu0 0
        %1335 = vmatprep.subr.bf16.mxu0 0
        %1336 = vmatpush1.bf16.msra.mxu0 0
        %1337 = vmatprep.subr.bf16.mxu0 0
        %1338 = vmatpush1.bf16.msra.mxu0 0
        %1339 = vmatprep.subr.bf16.mxu0 0
        %1340 = vmatpush1.bf16.msra.mxu0 0
        %1341 = vmatprep.subr.bf16.mxu0 0
        %1342 = vmatpush1.bf16.msra.mxu0 0
        %1343 = vmatprep.mubr.bf16.mxu0 0
        %1344 = vmatmul.mubr.bf16.gmra.mrb[0].mxu0 %v1238
        %v1345 = vpop.f32.mrb[0].mxu0
        %v1346 = vadd.f32 0.0, %v1345
        %v1347 = vpop.f32.mrb[0].mxu0
        %v1348 = vpop.f32.mrb[0].mxu0
        %v1349 = vadd.f32 0.0, %v1348
        %v1350 = vpop.f32.mrb[0].mxu0
        %1351 = vmatprep.mubr.bf16.mxu0 0
        %1352 = vmatmul.mubr.bf16.gmra.mrb[0].mxu0 %v1239
        %v1353 = vpop.f32.mrb[0].mxu0
        %v1354 = vadd.f32 0.0, %v1353
        %v1355 = vpop.f32.mrb[0].mxu0
        %v1356 = vpop.f32.mrb[0].mxu0
        %v1357 = vadd.f32 0.0, %v1356
        %v1358 = vpop.f32.mrb[0].mxu0
        %1359 = vmatprep.mubr.bf16.mxu0 0
        %1360 = vmatmul.mubr.bf16.gmra.mrb[0].mxu0 %v1240
        %v1361 = vpop.f32.mrb[0].mxu0
        %v1362 = vadd.f32 0.0, %v1361
        %v1363 = vpop.f32.mrb[0].mxu0
        %v1364 = vpop.f32.mrb[0].mxu0
        %v1365 = vadd.f32 0.0, %v1364
        %v1366 = vpop.f32.mrb[0].mxu0
        %1367 = vmatprep.mubr.bf16.mxu0 0
        %1368 = vmatmul.mubr.bf16.gmra.mrb[0].mxu0 %v1241
        %v1369 = vpop.f32.mrb[0].mxu0
        %v1370 = vadd.f32 0.0, %v1369
        %v1371 = vpop.f32.mrb[0].mxu0
        %v1372 = vpop.f32.mrb[0].mxu0
        %v1373 = vadd.f32 0.0, %v1372
        %v1374 = vpop.f32.mrb[0].mxu0
        %1375 = vmatprep.mubr.bf16.mxu0 0
        %1376 = vmatmul.mubr.bf16.gmra.mrb[0].mxu0 %v1242
        %v1377 = vpop.f32.mrb[0].mxu0
        %v1378 = vadd.f32 0.0, %v1377
        %v1379 = vpop.f32.mrb[0].mxu0
        %v1380 = vpop.f32.mrb[0].mxu0
        %v1381 = vadd.f32 0.0, %v1380
        %v1382 = vpop.f32.mrb[0].mxu0
        %1383 = vmatprep.mubr.bf16.mxu0 0
        %1384 = vmatmul.mubr.bf16.gmra.mrb[0].mxu0 %v1243
        %v1385 = vpop.f32.mrb[0].mxu0
        %v1386 = vadd.f32 0.0, %v1385
        %v1387 = vpop.f32.mrb[0].mxu0
        %v1388 = vpop.f32.mrb[0].mxu0
        %v1389 = vadd.f32 0.0, %v1388
        %v1390 = vpop.f32.mrb[0].mxu0
        %1391 = vmatprep.mubr.bf16.mxu0 0
        %1392 = vmatmul.mubr.bf16.gmra.mrb[0].mxu0 %v1244
        %v1393 = vpop.f32.mrb[0].mxu0
        %v1394 = vadd.f32 0.0, %v1393
        %v1395 = vpop.f32.mrb[0].mxu0
        %v1396 = vpop.f32.mrb[0].mxu0
        %v1397 = vadd.f32 0.0, %v1396
        %v1398 = vpop.f32.mrb[0].mxu0
        %1399 = vmatprep.mubr.bf16.mxu0 0
        %1400 = vmatmul.mubr.bf16.gmra.mrb[0].mxu0 %v1245
        %v1401 = vpop.f32.mrb[0].mxu0
        %v1402 = vadd.f32 0.0, %v1401
        %v1403 = vpop.f32.mrb[0].mxu0
        %v1404 = vpop.f32.mrb[0].mxu0
        %v1405 = vadd.f32 0.0, %v1404
        %v1406 = vpop.f32.mrb[0].mxu0
        %1407 = vdwg.mxu0
        %1408 = vst [vmem:[#allocation2] sm:$0xff] %v1346
        %1409 = vst [vmem:[#allocation2 + $0x8] sm:$0xff] %v1349
        %1410 = vst [vmem:[#allocation2 + $0x10] sm:$0xff] %v1354
        %1411 = vst [vmem:[#allocation2 + $0x18] sm:$0xff] %v1357
        %1412 = vst [vmem:[#allocation2 + $0x20] sm:$0xff] %v1362
        %1413 = vst [vmem:[#allocation2 + $0x28] sm:$0xff] %v1365
        %1414 = vst [vmem:[#allocation2 + $0x30] sm:$0xff] %v1370
        %1415 = vst [vmem:[#allocation2 + $0x38] sm:$0xff] %v1373
        %1416 = vst [vmem:[#allocation2 + $0x40] sm:$0xff] %v1378
        %1417 = vst [vmem:[#allocation2 + $0x48] sm:$0xff] %v1381
        %1418 = vst [vmem:[#allocation2 + $0x50] sm:$0xff] %v1386
        %1419 = vst [vmem:[#allocation2 + $0x58] sm:$0xff] %v1389
        %1420 = vst [vmem:[#allocation2 + $0x60] sm:$0xff] %v1394
        %1421 = vst [vmem:[#allocation2 + $0x68] sm:$0xff] %v1397
        %1422 = vst [vmem:[#allocation2 + $0x70] sm:$0xff] %v1402
        %1423 = vst [vmem:[#allocation2 + $0x78] sm:$0xff] %v1405
        %v1424 = vld [vmem:[#allocation2] sm:$0xff]
        %v1425 = vld [vmem:[#allocation2 + $0x8] sm:$0xff]
        %v1426 = vld [vmem:[#allocation2 + $0x10] sm:$0xff]
        %v1427 = vld [vmem:[#allocation2 + $0x18] sm:$0xff]
        %v1428 = vld [vmem:[#allocation2 + $0x20] sm:$0xff]
        %v1429 = vld [vmem:[#allocation2 + $0x28] sm:$0xff]
        %v1430 = vld [vmem:[#allocation2 + $0x30] sm:$0xff]
        %v1431 = vld [vmem:[#allocation2 + $0x38] sm:$0xff]
        %v1432 = vld [vmem:[#allocation2 + $0x40] sm:$0xff]
        %v1433 = vld [vmem:[#allocation2 + $0x48] sm:$0xff]
        %v1434 = vld [vmem:[#allocation2 + $0x50] sm:$0xff]
        %v1435 = vld [vmem:[#allocation2 + $0x58] sm:$0xff]
        %v1436 = vld [vmem:[#allocation2 + $0x60] sm:$0xff]
        %v1437 = vld [vmem:[#allocation2 + $0x68] sm:$0xff]
        %v1438 = vld [vmem:[#allocation2 + $0x70] sm:$0xff]
        %v1439 = vld [vmem:[#allocation2 + $0x78] sm:$0xff]
        %v1440 = vpack.c.bf16 %v1425, %v1424
        %v1441 = vpack.c.bf16 %v1427, %v1426
        %v1442 = vpack.c.bf16 %v1429, %v1428
        %v1443 = vpack.c.bf16 %v1431, %v1430
        %v1444 = vpack.c.bf16 %v1433, %v1432
        %v1445 = vpack.c.bf16 %v1435, %v1434
        %v1446 = vpack.c.bf16 %v1437, %v1436
        %v1447 = vpack.c.bf16 %v1439, %v1438
        %v1448 = vld [vmem:[#allocation3] sm:$0xf]
        %v1449 = vld [vmem:[#allocation3 + $0x4] sm:$0xf]
        %v1450 = vld [vmem:[#allocation3 + $0x8] sm:$0xf]
        %v1451 = vld [vmem:[#allocation3 + $0xc] sm:$0xf]
        %v1452 = vld [vmem:[#allocation3 + $0x10] sm:$0xf]
        %v1453 = vld [vmem:[#allocation3 + $0x14] sm:$0xf]
        %v1454 = vld [vmem:[#allocation3 + $0x18] sm:$0xf]
        %v1455 = vld [vmem:[#allocation3 + $0x1c] sm:$0xf]
        %v1456 = vld [vmem:[#allocation3 + $0x20] sm:$0xf]
        %v1457 = vld [vmem:[#allocation3 + $0x24] sm:$0xf]
        %v1458 = vld [vmem:[#allocation3 + $0x28] sm:$0xf]
        %v1459 = vld [vmem:[#allocation3 + $0x2c] sm:$0xf]
        %v1460 = vld [vmem:[#allocation3 + $0x30] sm:$0xf]
        %v1461 = vld [vmem:[#allocation3 + $0x34] sm:$0xf]
        %v1462 = vld [vmem:[#allocation3 + $0x38] sm:$0xf]
        %v1463 = vld [vmem:[#allocation3 + $0x3c] sm:$0xf]
        %v1480 = vunpack.c.l.b16 %v1448
        %v1481 = vunpack.c.l.b16 %v1449
        %v1482 = vunpack.c.l.b16 %v1450
        %v1483 = vunpack.c.l.b16 %v1451
        %v1484 = vunpack.c.l.b16 %v1452
        %v1485 = vunpack.c.l.b16 %v1453
        %v1486 = vunpack.c.l.b16 %v1454
        %v1487 = vunpack.c.l.b16 %v1455
        %v1488 = vunpack.c.l.b16 %v1456
        %v1489 = vunpack.c.l.b16 %v1457
        %v1490 = vunpack.c.l.b16 %v1458
        %v1491 = vunpack.c.l.b16 %v1459
        %v1492 = vunpack.c.l.b16 %v1460
        %v1493 = vunpack.c.l.b16 %v1461
        %v1494 = vunpack.c.l.b16 %v1462
        %v1495 = vunpack.c.l.b16 %v1463
        %v1496 = vpack.c.b16 %v1481, %v1480
        %v1497 = vpack.c.b16 %v1483, %v1482
        %v1498 = vpack.c.b16 %v1485, %v1484
        %v1499 = vpack.c.b16 %v1487, %v1486
        %v1500 = vpack.c.b16 %v1489, %v1488
        %v1501 = vpack.c.b16 %v1491, %v1490
        %v1502 = vpack.c.b16 %v1493, %v1492
        %v1503 = vpack.c.b16 %v1495, %v1494
        %1512 = vmatprep.subr.bf16.mxu0 0
        %1513 = vmatpush1.bf16.msra.mxu0 %v1496
        %1514 = vmatprep.subr.bf16.mxu0 0
        %1515 = vmatpush1.bf16.msra.mxu0 %v1497
        %1516 = vmatprep.subr.bf16.mxu0 0
        %1517 = vmatpush1.bf16.msra.mxu0 %v1498
        %1518 = vmatprep.subr.bf16.mxu0 0
        %1519 = vmatpush1.bf16.msra.mxu0 %v1499
        %1520 = vmatprep.subr.bf16.mxu0 0
        %1521 = vmatpush1.bf16.msra.mxu0 %v1500
        %1522 = vmatprep.subr.bf16.mxu0 0
        %1523 = vmatpush1.bf16.msra.mxu0 %v1501
        %1524 = vmatprep.subr.bf16.mxu0 0
        %1525 = vmatpush1.bf16.msra.mxu0 %v1502
        %1526 = vmatprep.subr.bf16.mxu0 0
        %1527 = vmatpush1.bf16.msra.mxu0 %v1503
        %1528 = vmatprep.subr.bf16.mxu0 0
        %1529 = vmatpush1.bf16.msra.mxu0 0
        %1530 = vmatprep.subr.bf16.mxu0 0
        %1531 = vmatpush1.bf16.msra.mxu0 0
        %1532 = vmatprep.subr.bf16.mxu0 0
        %1533 = vmatpush1.bf16.msra.mxu0 0
        %1534 = vmatprep.subr.bf16.mxu0 0
        %1535 = vmatpush1.bf16.msra.mxu0 0
        %1536 = vmatprep.subr.bf16.mxu0 0
        %1537 = vmatpush1.bf16.msra.mxu0 0
        %1538 = vmatprep.subr.bf16.mxu0 0
        %1539 = vmatpush1.bf16.msra.mxu0 0
        %1540 = vmatprep.subr.bf16.mxu0 0
        %1541 = vmatpush1.bf16.msra.mxu0 0
        %1542 = vmatprep.subr.bf16.mxu0 0
        %1543 = vmatpush1.bf16.msra.mxu0 0
        %1544 = vmatprep.mubr.bf16.mxu0 0
        %1545 = vmatmul.mubr.bf16.gmra.mrb[0].mxu0 %v1440
        %v1546 = vpop.f32.mrb[0].mxu0
        %v1547 = vadd.f32 0.0, %v1546
        %v1548 = vpop.f32.mrb[0].mxu0
        %v1549 = vpop.f32.mrb[0].mxu0
        %v1550 = vadd.f32 0.0, %v1549
        %v1551 = vpop.f32.mrb[0].mxu0
        %1552 = vmatprep.mubr.bf16.mxu0 0
        %1553 = vmatmul.mubr.bf16.gmra.mrb[0].mxu0 %v1441
        %v1554 = vpop.f32.mrb[0].mxu0
        %v1555 = vadd.f32 0.0, %v1554
        %v1556 = vpop.f32.mrb[0].mxu0
        %v1557 = vpop.f32.mrb[0].mxu0
        %v1558 = vadd.f32 0.0, %v1557
        %v1559 = vpop.f32.mrb[0].mxu0
        %1560 = vmatprep.mubr.bf16.mxu0 0
        %1561 = vmatmul.mubr.bf16.gmra.mrb[0].mxu0 %v1442
        %v1562 = vpop.f32.mrb[0].mxu0
        %v1563 = vadd.f32 0.0, %v1562
        %v1564 = vpop.f32.mrb[0].mxu0
        %v1565 = vpop.f32.mrb[0].mxu0
        %v1566 = vadd.f32 0.0, %v1565
        %v1567 = vpop.f32.mrb[0].mxu0
        %1568 = vmatprep.mubr.bf16.mxu0 0
        %1569 = vmatmul.mubr.bf16.gmra.mrb[0].mxu0 %v1443
        %v1570 = vpop.f32.mrb[0].mxu0
        %v1571 = vadd.f32 0.0, %v1570
        %v1572 = vpop.f32.mrb[0].mxu0
        %v1573 = vpop.f32.mrb[0].mxu0
        %v1574 = vadd.f32 0.0, %v1573
        %v1575 = vpop.f32.mrb[0].mxu0
        %1576 = vmatprep.mubr.bf16.mxu0 0
        %1577 = vmatmul.mubr.bf16.gmra.mrb[0].mxu0 %v1444
        %v1578 = vpop.f32.mrb[0].mxu0
        %v1579 = vadd.f32 0.0, %v1578
        %v1580 = vpop.f32.mrb[0].mxu0
        %v1581 = vpop.f32.mrb[0].mxu0
        %v1582 = vadd.f32 0.0, %v1581
        %v1583 = vpop.f32.mrb[0].mxu0
        %1584 = vmatprep.mubr.bf16.mxu0 0
        %1585 = vmatmul.mubr.bf16.gmra.mrb[0].mxu0 %v1445
        %v1586 = vpop.f32.mrb[0].mxu0
        %v1587 = vadd.f32 0.0, %v1586
        %v1588 = vpop.f32.mrb[0].mxu0
        %v1589 = vpop.f32.mrb[0].mxu0
        %v1590 = vadd.f32 0.0, %v1589
        %v1591 = vpop.f32.mrb[0].mxu0
        %1592 = vmatprep.mubr.bf16.mxu0 0
        %1593 = vmatmul.mubr.bf16.gmra.mrb[0].mxu0 %v1446
        %v1594 = vpop.f32.mrb[0].mxu0
        %v1595 = vadd.f32 0.0, %v1594
        %v1596 = vpop.f32.mrb[0].mxu0
        %v1597 = vpop.f32.mrb[0].mxu0
        %v1598 = vadd.f32 0.0, %v1597
        %v1599 = vpop.f32.mrb[0].mxu0
        %1600 = vmatprep.mubr.bf16.mxu0 0
        %1601 = vmatmul.mubr.bf16.gmra.mrb[0].mxu0 %v1447
        %v1602 = vpop.f32.mrb[0].mxu0
        %v1603 = vadd.f32 0.0, %v1602
        %v1604 = vpop.f32.mrb[0].mxu0
        %v1605 = vpop.f32.mrb[0].mxu0
        %v1606 = vadd.f32 0.0, %v1605
        %v1607 = vpop.f32.mrb[0].mxu0
        %1608 = vdwg.mxu0
        %1609 = vst [vmem:[#allocation2] sm:$0xff] %v1547
        %1610 = vst [vmem:[#allocation2 + $0x8] sm:$0xff] %v1550
        %1611 = vst [vmem:[#allocation2 + $0x10] sm:$0xff] %v1555
        %1612 = vst [vmem:[#allocation2 + $0x18] sm:$0xff] %v1558
        %1613 = vst [vmem:[#allocation2 + $0x20] sm:$0xff] %v1563
        %1614 = vst [vmem:[#allocation2 + $0x28] sm:$0xff] %v1566
        %1615 = vst [vmem:[#allocation2 + $0x30] sm:$0xff] %v1571
        %1616 = vst [vmem:[#allocation2 + $0x38] sm:$0xff] %v1574
        %1617 = vst [vmem:[#allocation2 + $0x40] sm:$0xff] %v1579
        %1618 = vst [vmem:[#allocation2 + $0x48] sm:$0xff] %v1582
        %1619 = vst [vmem:[#allocation2 + $0x50] sm:$0xff] %v1587
        %1620 = vst [vmem:[#allocation2 + $0x58] sm:$0xff] %v1590
        %1621 = vst [vmem:[#allocation2 + $0x60] sm:$0xff] %v1595
        %1622 = vst [vmem:[#allocation2 + $0x68] sm:$0xff] %v1598
        %1623 = vst [vmem:[#allocation2 + $0x70] sm:$0xff] %v1603
        %1624 = vst [vmem:[#allocation2 + $0x78] sm:$0xff] %v1606
        %v1625 = vld [vmem:[#allocation2] sm:$0xff]
        %v1626 = vld [vmem:[#allocation2 + $0x8] sm:$0xff]
        %v1627 = vld [vmem:[#allocation2 + $0x10] sm:$0xff]
        %v1628 = vld [vmem:[#allocation2 + $0x18] sm:$0xff]
        %v1629 = vld [vmem:[#allocation2 + $0x20] sm:$0xff]
        %v1630 = vld [vmem:[#allocation2 + $0x28] sm:$0xff]
        %v1631 = vld [vmem:[#allocation2 + $0x30] sm:$0xff]
        %v1632 = vld [vmem:[#allocation2 + $0x38] sm:$0xff]
        %v1633 = vld [vmem:[#allocation2 + $0x40] sm:$0xff]
        %v1634 = vld [vmem:[#allocation2 + $0x48] sm:$0xff]
        %v1635 = vld [vmem:[#allocation2 + $0x50] sm:$0xff]
        %v1636 = vld [vmem:[#allocation2 + $0x58] sm:$0xff]
        %v1637 = vld [vmem:[#allocation2 + $0x60] sm:$0xff]
        %v1638 = vld [vmem:[#allocation2 + $0x68] sm:$0xff]
        %v1639 = vld [vmem:[#allocation2 + $0x70] sm:$0xff]
        %v1640 = vld [vmem:[#allocation2 + $0x78] sm:$0xff]
        %1641 = vst [vmem:[%s176] sm:$0xff] %v1625
        %1642 = vst [vmem:[%s176 + $0x8] sm:$0xff] %v1626
        %1643 = vst [vmem:[%s176 + $0x10] sm:$0xff] %v1627
        %1644 = vst [vmem:[%s176 + $0x18] sm:$0xff] %v1628
        %1645 = vst [vmem:[%s176 + $0x20] sm:$0xff] %v1629
        %1646 = vst [vmem:[%s176 + $0x28] sm:$0xff] %v1630
        %1647 = vst [vmem:[%s176 + $0x30] sm:$0xff] %v1631
        %1648 = vst [vmem:[%s176 + $0x38] sm:$0xff] %v1632
        %1649 = vst [vmem:[%s176 + $0x40] sm:$0xff] %v1633
        %1650 = vst [vmem:[%s176 + $0x48] sm:$0xff] %v1634
        %1651 = vst [vmem:[%s176 + $0x50] sm:$0xff] %v1635
        %1652 = vst [vmem:[%s176 + $0x58] sm:$0xff] %v1636
        %1653 = vst [vmem:[%s176 + $0x60] sm:$0xff] %v1637
        %1654 = vst [vmem:[%s176 + $0x68] sm:$0xff] %v1638
        %1655 = vst [vmem:[%s176 + $0x70] sm:$0xff] %v1639
        %1656 = vst [vmem:[%s176 + $0x78] sm:$0xff] %v1640
        %s1657 = sand.u32 %s75, 1
        %s1658 = scalar_lea.sflag [#allocation5], %s1657
        %s1659 = sand.u32 %s75, 1
        %s1660 = smul.addr %s1659, 128
        %s1661 = scalar_lea.vmem [#allocation8], %s1660
        // Predicated region
        $region37: #{tpu_custom_call.1} parent=27 // pred_check
          %p1662 = pneg %p85
        $region38: #{tpu_custom_call.1} parent=27 // pred_check_branch
          %1664 = sbr.rel (%p1662) target = $region40
        $region39: #{tpu_custom_call.1} parent=27 // pred_region
          %s1665 = smul.u32 16, %s20
          %s1667 = ssub.s32 2048, 2048
          %1668 = vsyncadd %s1658, %s1667
          %s1669 = smul.addr %s1665, 128
          %s1670 = scalar_lea.hbm %s2, %s1669
          %s1671 = sshll.u32 %s1661, 4
          %s1672 = int_to_ptr.vmem [resolvable:$true] %s1671
          %1677 = dma.vmem_to_hbm [thread:$0]  %s1672, 2048, %s1670, %s1658, 128, 128, 8
        $region40: #{tpu_custom_call.1} parent=27 // pred_fallthru
          _
      $region28: #{tpu_custom_call.1} parent=5 // pred_fallthru
        _
      %p1678 = scmp.le.s32.totalorder 2, %s15
      // Predicated region
      $region41: #{tpu_custom_call.1} parent=5 // pred_check
        %p1679 = pneg %p1678
      $region42: #{tpu_custom_call.1} parent=5 // pred_check_branch
        %1681 = sbr.rel (%p1679) target = $region44
      $region43: #{tpu_custom_call.1} parent=5 // pred_region
        %s1682 = ssub.s32 %s15, 2
        // Predicated region
        $region45: #{tpu_custom_call.1} parent=43 // pred_check
          %p1683 = pneg %p91
        $region46: #{tpu_custom_call.1} parent=43 // pred_check_branch
          %1685 = sbr.rel (%p1683) target = $region48
        $region47: #{tpu_custom_call.1} parent=43 // pred_region
          %s1686 = sand.u32 %s76, 1
          %s1687 = scalar_lea.sflag [#allocation5], %s1686
          %s1688 = sand.u32 %s76, 1
          %s1689 = smul.addr %s1688, 128
          %s1690 = scalar_lea.vmem [#allocation8], %s1689
          %1691 = dma.done %s1687, 2048
        $region48: #{tpu_custom_call.1} parent=43 // pred_fallthru
          _
      $region44: #{tpu_custom_call.1} parent=5 // pred_fallthru
        _
    $region6: #{tpu_custom_call.1} parent=1 // loop_footer
      %s19 = sadd.s32 1, %s15
    $region7: #{tpu_custom_call.1} parent=1 // loop_footer_branch
      %14 = sbr.rel target = $region3
    $region8: #{tpu_custom_call.1} parent=1 // loop_exit
      _
    %1692 = vsyncpa [#allocation4], 1
    %s1693 = scalar_lea.sflag [#allocation4], 1
    %1694 = vsyncpa %s1693, 1
    %1695 = vsyncpa [#allocation7], 1
    %s1696 = scalar_lea.sflag [#allocation7], 1
    %1697 = vsyncpa %s1696, 1
    %1698 = vsyncpa [#allocation5], 1
    %s1699 = scalar_lea.sflag [#allocation5], 1
    %1700 = vsyncpa %s1699, 1

</llo_original>
